<compile_context>
chip_gen: v7x
topology: tpu7x:2x2x1
jax: 0.10.0
libtpu: 0.0.40
codegen_flags: <defaults>
</compile_context>

<pallas_src>
import math
from functools import partial

import jax
import jax.numpy as jnp
from jax.experimental import pallas as pl
from jax.experimental.pallas import tpu as pltpu

F32 = jnp.float32


# ----------------------------------------------------------------- fused kernels ------
def _sdpa_kernel_2d(q_ref, k_ref, v_ref, ctx_ref, attn_ref, *, scale):
    # q_ref: (tq, D)   k_ref: (Sk, D)   v_ref: (Sk, Dv)
    # ctx_ref: (tq, Dv)   attn_ref: (tq, Sk)
    k = k_ref[...]
    v = v_ref[...]
    # Fold `scale` into the small (tq, D) Q tile, in f32, before any downcast.
    q = (q_ref[...].astype(F32) * scale).astype(k.dtype)

    # Q @ K^T on the MXU, f32 accumulation.
    s = jax.lax.dot_general(q, k, (((1,), (1,)), ((), ())),
                            preferred_element_type=F32)

    # Numerically-stable softmax over the key axis (f32 statistics).
    m = jnp.max(s, axis=-1, keepdims=True)
    p = jnp.exp(s - m)
    denom = jnp.sum(p, axis=-1, keepdims=True)
    attn = p * pl.reciprocal(denom, approx=True)

    # attn @ V on the MXU, f32 accumulation.
    ctx = jnp.dot(attn.astype(v.dtype), v, preferred_element_type=F32)

    attn_ref[...] = attn.astype(attn_ref.dtype)
    ctx_ref[...] = ctx.astype(ctx_ref.dtype)


def _sdpa_kernel_3d(q_ref, k_ref, v_ref, ctx_ref, attn_ref, *, scale):
    # Same as above but with G > 1 heads per grid step (batched contraction).
    k = k_ref[...]
    v = v_ref[...]
    q = (q_ref[...].astype(F32) * scale).astype(k.dtype)

    s = jnp.einsum("gqd,gkd->gqk", q, k, preferred_element_type=F32)

    m = jnp.max(s, axis=-1, keepdims=True)
    p = jnp.exp(s - m)
    denom = jnp.sum(p, axis=-1, keepdims=True)
    attn = p * pl.reciprocal(denom, approx=True)

    ctx = jnp.einsum("gqk,gkd->gqd", attn.astype(v.dtype), v,
                     preferred_element_type=F32)

    attn_ref[...] = attn.astype(attn_ref.dtype)
    ctx_ref[...] = ctx.astype(ctx_ref.dtype)


# ------------------------------------------------------------------------- wrapper ----
def _physical_vmem_bytes():
    try:
        return int(pltpu.get_tpu_info().vmem_capacity_bytes)
    except Exception:
        return 64 << 20  # conservative: v7x has 64 MiB per TensorCore


def scaled_dot_product_attention(Q, K, V, d_k=None, *, block_q=None, block_bh=None,
                                 compute_dtype=None, attn_dtype=None,
                                 vmem_limit_bytes=None, interpret=False):
    """Returns (context, attn), matching the PyTorch module's forward."""
    *batch, Sq, D = Q.shape
    *batch_k, Sk, Dk = K.shape
    *batch_v, Skv, Dv = V.shape
    assert Dk == D and Skv == Sk
    assert tuple(batch) == tuple(batch_k) == tuple(batch_v)
    if d_k is None:
        d_k = D                                   # sensible default: the head dim
    scale = 1.0 / math.sqrt(float(d_k))

    BH = 1
    for b in batch:
        BH *= int(b)
    q3 = Q.reshape(BH, Sq, D)
    k3 = K.reshape(BH, Sk, D)
    v3 = V.reshape(BH, Sk, Dv)

    # bf16 compute path: cast K/V at the boundary (halves their DMA + VMEM).
    # Q keeps its input dtype so the kernel can fold `scale` in f32 first.
    if compute_dtype is not None and k3.dtype != jnp.dtype(compute_dtype):
        k3 = k3.astype(compute_dtype)
        v3 = v3.astype(compute_dtype)

    ctx_dtype = Q.dtype
    if attn_dtype is None:
        # Cutting the dominant HBM stream (attn writeback) is the biggest lever;
        # tie it to the reduced-precision compute path, f32 otherwise.
        attn_dtype = compute_dtype if compute_dtype is not None else Q.dtype

    q_b = jnp.dtype(q3.dtype).itemsize
    kv_b = jnp.dtype(k3.dtype).itemsize
    attn_b = jnp.dtype(attn_dtype).itemsize
    ctx_b = jnp.dtype(ctx_dtype).itemsize

    phys_vmem = _physical_vmem_bytes()
    budget = int(phys_vmem * 0.7)                 # headroom for compiler scratch

    def step_bytes(bq, g):
        kv_res = 2 * g * Sk * (D + Dv) * kv_b        # K/V tiles (double-buffered)
        q_io = 2 * g * bq * (D * q_b + Dv * ctx_b)   # Q in + ctx out
        attn_io = 2 * g * bq * Sk * attn_b           # attn out (dominant stream)
        inter = 2 * g * bq * Sk * 4                  # s / p f32 temporaries
        return kv_res + q_io + attn_io + inter

    # VMEM-aware query tile: largest (8,128)-friendly divisor of Sq, capped at
    # 256 (v5e scoped default / v7x 64 MiB), that fits the per-step budget.
    if block_q is None:
        g0 = block_bh if block_bh is not None else 1
        cands = [c for c in (256, 128, 64, 32, 16, 8) if c <= Sq and Sq % c == 0]
        if not cands:
            block_q = Sq                          # ragged Sq: full-extent block
        else:
            block_q = cands[-1]
            for c in cands:
                if step_bytes(c, g0) <= budget:
                    block_q = c
                    break
    assert Sq % block_q == 0, "Sq must be divisible by block_q"

    # Batch several heads per grid step when per-head work is tiny (amortizes
    # ~0.35us/step pipeline overhead), keeping >=2 steps on the batch-head axis
    # so megacore shards along BH (K/V fetched once per head) and staying inside
    # the VMEM budget.
    if block_bh is None:
        block_bh = 1
        while (block_bh * 2 <= BH
               and BH % (block_bh * 2) == 0
               and BH // (block_bh * 2) >= 2
               and block_q * Sk <= 256 * 1024
               and step_bytes(block_q, block_bh * 2) <= budget):
            block_bh *= 2
    G = block_bh
    assert BH % G == 0

    if vmem_limit_bytes is None:
        vmem_limit_bytes = int(min(phys_vmem,
                                   max(2 * step_bytes(block_q, G), 32 << 20)))

    grid = (BH // G, Sq // block_q)

    if G == 1:
        # Squeeze the unit batch dim: plain 2-D MXU contractions.
        kernel = partial(_sdpa_kernel_2d, scale=scale)
        in_specs = [
            pl.BlockSpec((None, block_q, D), lambda b, i: (b, i, 0)),
            pl.BlockSpec((None, Sk, D), lambda b, i: (b, 0, 0)),
            pl.BlockSpec((None, Sk, Dv), lambda b, i: (b, 0, 0)),
        ]
        out_specs = (
            pl.BlockSpec((None, block_q, Dv), lambda b, i: (b, i, 0)),
            pl.BlockSpec((None, block_q, Sk), lambda b, i: (b, i, 0)),
        )
    else:
        kernel = partial(_sdpa_kernel_3d, scale=scale)
        in_specs = [
            pl.BlockSpec((G, block_q, D), lambda b, i: (b, i, 0)),
            pl.BlockSpec((G, Sk, D), lambda b, i: (b, 0, 0)),
            pl.BlockSpec((G, Sk, Dv), lambda b, i: (b, 0, 0)),
        ]
        out_specs = (
            pl.BlockSpec((G, block_q, Dv), lambda b, i: (b, i, 0)),
            pl.BlockSpec((G, block_q, Sk), lambda b, i: (b, i, 0)),
        )

    # NOTE: the key axis stays resident per grid step because `attn` is a
    # required output (flash-style K/V streaming buys nothing here).
    # TODO(synk): offer a context-only flash variant for callers that drop attn.
    ctx, attn = pl.pallas_call(
        kernel,
        out_shape=(jax.ShapeDtypeStruct((BH, Sq, Dv), ctx_dtype),
                   jax.ShapeDtypeStruct((BH, Sq, Sk), attn_dtype)),
        grid=grid,
        in_specs=in_specs,
        out_specs=out_specs,
        compiler_params=pltpu.CompilerParams(
            dimension_semantics=("parallel", "parallel"),
            vmem_limit_bytes=vmem_limit_bytes,
        ),
        interpret=interpret,
    )(q3, k3, v3)

    ctx = ctx.reshape(*batch, Sq, Dv)
    attn = attn.reshape(*batch, Sq, Sk)
    return ctx, attn


# ---------------------------------------------------------------------------- main ----
if __name__ == "__main__":
    B, H, S, D = 2, 4, 128, 64            # d_k = 64 as in the module default
    key = jax.random.PRNGKey(0)
    kq, kk, kv = jax.random.split(key, 3)
    Q = jax.random.normal(kq, (B, H, S, D), F32)
    K = jax.random.normal(kk, (B, H, S, D), F32)
    V = jax.random.normal(kv, (B, H, S, D), F32)

    # Pure-JAX reference of the PyTorch forward.
    scores = jnp.einsum("bhqd,bhkd->bhqk", Q, K) / math.sqrt(D)
    attn_ref = jax.nn.softmax(scores, axis=-1)
    ctx_ref = jnp.einsum("bhqk,bhkd->bhqd", attn_ref, V)

    # Default f32 path (auto block_q / block_bh, batched-heads kernel).
    fwd = jax.jit(partial(scaled_dot_product_attention, d_k=D))
    ctx, attn = fwd(Q, K, V)
    jax.block_until_ready((ctx, attn))
    assert ctx.shape == (B, H, S, D) and attn.shape == (B, H, S, S)
    assert bool(jnp.all(jnp.isfinite(ctx))) and bool(jnp.all(jnp.isfinite(attn)))
    assert bool(jnp.allclose(attn, attn_ref, atol=2e-2, rtol=2e-2))
    assert bool(jnp.allclose(ctx, ctx_ref, atol=2e-2, rtol=2e-2))

    # Squeezed single-head path (block_bh=1 -> 2-D MXU contractions).
    ctx1, attn1 = jax.jit(
        partial(scaled_dot_product_attention, d_k=D, block_bh=1))(Q, K, V)
    jax.block_until_ready((ctx1, attn1))
    assert bool(jnp.allclose(attn1, attn_ref, atol=2e-2, rtol=2e-2))
    assert bool(jnp.allclose(ctx1, ctx_ref, atol=2e-2, rtol=2e-2))

    # bf16 compute path: bf16 K/V DMA, bf16 attn writeback, f32 accumulation
    # and f32 softmax stats (the recommended configuration for v6e/v7x).
    ctx_b, attn_b = jax.jit(
        partial(scaled_dot_product_attention, d_k=D, compute_dtype=jnp.bfloat16)
    )(Q, K, V)
    jax.block_until_ready((ctx_b, attn_b))
    assert attn_b.dtype == jnp.bfloat16
    assert bool(jnp.all(jnp.isfinite(ctx_b))) and bool(jnp.all(jnp.isfinite(attn_b)))
    assert bool(jnp.allclose(attn_b.astype(F32), attn_ref, atol=5e-2, rtol=5e-2))
    assert bool(jnp.allclose(ctx_b.astype(F32), ctx_ref, atol=5e-2, rtol=5e-2))

    print("KERNEL_OK")
</pallas_src>

<mosaic_0001>
module attributes {stable_mosaic.version = 11 : i64} {
  func.func @_sdpa_kernel_3d(%arg0: i32, %arg1: i32, %arg2: memref<4x128x64xf32, #tpu.memory_space<vmem>>, %arg3: memref<4x128x64xf32, #tpu.memory_space<vmem>>, %arg4: memref<4x128x64xf32, #tpu.memory_space<vmem>>, %arg5: memref<4x128x64xf32, #tpu.memory_space<vmem>>, %arg6: memref<4x128x128xf32, #tpu.memory_space<vmem>>) attributes {dimension_semantics = [#tpu.dimension_semantics<parallel>, #tpu.dimension_semantics<parallel>], iteration_bounds = array<i64: 2, 1>, scalar_prefetch = 0 : i64, scratch_operands = 0 : i64, tpu.core_type = #tpu.core_type<tc>, window_params = [{transform_indices = @transform_0, window_bounds = array<i64: 4, 128, 64>}, {transform_indices = @transform_1, window_bounds = array<i64: 4, 128, 64>}, {transform_indices = @transform_2, window_bounds = array<i64: 4, 128, 64>}, {transform_indices = @transform_3, window_bounds = array<i64: 4, 128, 64>}, {transform_indices = @transform_4, window_bounds = array<i64: 4, 128, 128>}]} {
    %c0 = arith.constant 0 : index
    %c0_0 = arith.constant 0 : index
    %c0_1 = arith.constant 0 : index
    %0 = vector.load %arg3[%c0, %c0_0, %c0_1] : memref<4x128x64xf32, #tpu.memory_space<vmem>>, vector<4x128x64xf32>
    %c0_2 = arith.constant 0 : index
    %c0_3 = arith.constant 0 : index
    %c0_4 = arith.constant 0 : index
    %1 = vector.load %arg4[%c0_2, %c0_3, %c0_4] : memref<4x128x64xf32, #tpu.memory_space<vmem>>, vector<4x128x64xf32>
    %c0_5 = arith.constant 0 : index
    %c0_6 = arith.constant 0 : index
    %c0_7 = arith.constant 0 : index
    %2 = vector.load %arg2[%c0_5, %c0_6, %c0_7] : memref<4x128x64xf32, #tpu.memory_space<vmem>>, vector<4x128x64xf32>
    %cst = arith.constant 1.250000e-01 : f32
    %3 = vector.broadcast %cst : f32 to vector<4x128x64xf32>
    %4 = arith.mulf %2, %3 : vector<4x128x64xf32>
    "tpu.trace_start"() <{level = 10 : i32, message = "gqd,gkd->gqk"}> : () -> ()
    %cst_8 = arith.constant dense<0.000000e+00> : vector<4x128x128xf32>
    %5 = tpu.matmul %4, %0, %cst_8 {dimension_numbers = #tpu.dot_dimension_numbers<[2], [2], [1], [1], [0, 0, 0, 1, 1, 1], [0], [0]>} : vector<4x128x64xf32>, vector<4x128x64xf32>, vector<4x128x128xf32> -> vector<4x128x128xf32>
    "tpu.trace_stop"() : () -> ()
    %cst_9 = arith.constant dense<0xFF800000> : vector<4x128xf32>
    %6 = vector.multi_reduction <maximumf>, %5, %cst_9 [2] : vector<4x128x128xf32> to vector<4x128xf32>
    %7 = vector.shape_cast %6 : vector<4x128xf32> to vector<4x128x1xf32>
    %8 = vector.broadcast %7 : vector<4x128x1xf32> to vector<4x128x128xf32>
    %9 = arith.subf %5, %8 : vector<4x128x128xf32>
    %10 = math.exp %9 : vector<4x128x128xf32>
    %cst_10 = arith.constant dense<0.000000e+00> : vector<4x128xf32>
    %11 = vector.multi_reduction <add>, %10, %cst_10 [2] : vector<4x128x128xf32> to vector<4x128xf32>
    %12 = vector.shape_cast %11 : vector<4x128xf32> to vector<4x128x1xf32>
    %13 = tpu.reciprocal %12 {approx = true} : vector<4x128x1xf32> -> vector<4x128x1xf32>
    %14 = vector.broadcast %13 : vector<4x128x1xf32> to vector<4x128x128xf32>
    %15 = arith.mulf %10, %14 : vector<4x128x128xf32>
    "tpu.trace_start"() <{level = 10 : i32, message = "gqk,gkd->gqd"}> : () -> ()
    %cst_11 = arith.constant dense<0.000000e+00> : vector<4x128x64xf32>
    %16 = tpu.matmul %15, %1, %cst_11 {dimension_numbers = #tpu.dot_dimension_numbers<[2], [1], [1], [2], [0, 0, 0, 1, 1, 2], [0], [0]>} : vector<4x128x128xf32>, vector<4x128x64xf32>, vector<4x128x64xf32> -> vector<4x128x64xf32>
    "tpu.trace_stop"() : () -> ()
    %c0_12 = arith.constant 0 : index
    %c0_13 = arith.constant 0 : index
    %c0_14 = arith.constant 0 : index
    %17 = vector.load %arg6[%c0_12, %c0_13, %c0_14] : memref<4x128x128xf32, #tpu.memory_space<vmem>>, vector<4x128x128xf32>
    tpu.vector_store %arg6[%c0_12, %c0_13, %c0_14], %15 {strides = array<i32>} : memref<4x128x128xf32, #tpu.memory_space<vmem>>, vector<4x128x128xf32>,
    %c0_15 = arith.constant 0 : index
    %c0_16 = arith.constant 0 : index
    %c0_17 = arith.constant 0 : index
    %18 = vector.load %arg5[%c0_15, %c0_16, %c0_17] : memref<4x128x64xf32, #tpu.memory_space<vmem>>, vector<4x128x64xf32>
    tpu.vector_store %arg5[%c0_15, %c0_16, %c0_17], %16 {strides = array<i32>} : memref<4x128x64xf32, #tpu.memory_space<vmem>>, vector<4x128x64xf32>,
    return
  }
  func.func @transform_0(%arg0: i32, %arg1: i32) -> (i32, i32, i32) {
    %c0_i32 = arith.constant 0 : i32
    %c0_i32_0 = arith.constant 0 : i32
    return %arg0, %arg1, %c0_i32 : i32, i32, i32
  }
  func.func @transform_1(%arg0: i32, %arg1: i32) -> (i32, i32, i32) {
    %c0_i32 = arith.constant 0 : i32
    %c0_i32_0 = arith.constant 0 : i32
    %c0_i32_1 = arith.constant 0 : i32
    return %arg0, %c0_i32, %c0_i32_0 : i32, i32, i32
  }
  func.func @transform_2(%arg0: i32, %arg1: i32) -> (i32, i32, i32) {
    %c0_i32 = arith.constant 0 : i32
    %c0_i32_0 = arith.constant 0 : i32
    %c0_i32_1 = arith.constant 0 : i32
    return %arg0, %c0_i32, %c0_i32_0 : i32, i32, i32
  }
  func.func @transform_3(%arg0: i32, %arg1: i32) -> (i32, i32, i32) {
    %c0_i32 = arith.constant 0 : i32
    %c0_i32_0 = arith.constant 0 : i32
    return %arg0, %arg1, %c0_i32 : i32, i32, i32
  }
  func.func @transform_4(%arg0: i32, %arg1: i32) -> (i32, i32, i32) {
    %c0_i32 = arith.constant 0 : i32
    %c0_i32_0 = arith.constant 0 : i32
    return %arg0, %arg1, %c0_i32 : i32, i32, i32
  }
}

</mosaic_0001>

<llo_original>
// kernel: scaled_dot_product_attention.1
$region0: #{scaled_dot_product_attention.1}
  #allocation0 [shape = 'u32[]', space=smem, size = 0x4, offset = 0x4, fixed_abs, tag = 'smem constant byte address 0x4 - core index']
  #allocation1 [shape = 'u32[144,128]{1,0:T(1,128)}', space=vmem, size = 0x12000, scoped, tag = 'internal scratch']
  %s0 = inlined_call_operand.vmem [shape: f32[8,128,64], index: 0, kind: input, shape index: {}]
  %s1 = inlined_call_operand.vmem [shape: f32[8,128,64], index: 1, kind: input, shape index: {}]
  %s2 = inlined_call_operand.vmem [shape: f32[8,128,64], index: 2, kind: input, shape index: {}]
  %s3 = inlined_call_operand.vmem [shape: f32[8,128,64], index: 3, kind: output, shape index: {0}]
  %s4 = inlined_call_operand.hbm [shape: f32[8,128,128], index: 4, kind: output, shape index: {1}]
  %5 = xla_tuple %s3, %s4
  %s6 = sld [smem:[#allocation0]]
  $region53: #{scaled_dot_product_attention.1} parent=0
    _
  %s8 = ssub.s32 1, %s6
  %s9 = scalar_select 0, %s8, %s6
  $region1: #{scaled_dot_product_attention.1} parent=0
    #allocation2 [shape = 'u8[524288]{0}', space=vmem, size = 0x80000, scoped, tag = 'output window, operand 1']
    #allocation3 [shape = 's32[2]{0}', space=sflag, size = 0x8, scoped, tag = 'scoped memory for scaled_dot_product_attention.1']
    %10 = vsyncpa [#allocation3], 0
    %s11 = scalar_lea.sflag [#allocation3], 1
    %12 = vsyncpa %s11, 0
    loop: start=0, step=1, limit=4
    $region2: #{scaled_dot_product_attention.1} parent=1 // loop_pre_header
      _
    $region3: #{scaled_dot_product_attention.1} parent=1 // loop_header
      %s14 = sphi 0, %s18
      %p15 = scmp.ge.s32.totalorder %s14, 4
      %s21 = sphi 0, %s33
      %s22 = sphi 0, %s29
      %s23 = sphi 0, %s21
      %s24 = sphi 0, %s22
      %s25 = sphi 0, %s23
      %s26 = sphi 0, %s24
      %s38 = sphi 0, %s40
      %s41 = sphi 0, %s38
      %s42 = sphi 0, %s41
      %s58 = sphi 0, %s42
      %s64 = sphi 0, %s66
      %s67 = sphi 0, %s64
      %s68 = sphi 0, %s67
      %s84 = sphi 0, %s68
      %s90 = sphi 0, %s92
      %s93 = sphi 0, %s90
      %s94 = sphi 0, %s93
      %s110 = sphi 0, %s94
      %s118 = sphi 0, %s120
      %s121 = sphi 0, %s118
      %s122 = sphi 0, %s121
      %s138 = sphi 0, %s122
      %s146 = sphi 0, %s148
      %s149 = sphi 0, %s146
      %s150 = sphi 0, %s149
      %s166 = sphi 0, %s150
    $region4: #{scaled_dot_product_attention.1} parent=1 // loop_header_branch
      %17 = sbr.rel (%p15) target = $region8
    $region5: #{scaled_dot_product_attention.1} parent=1 // loop_body
      %s19 = ssub.s32 %s14, 1
      %s20 = ssub.s32 %s14, 2
      %s27 = sadd.s32 1, %s22
      %p28 = scmp.ge.s32.totalorder %s27, 1
      %s29 = scalar_select %p28, 0, %s27
      %s30 = sadd.s32 1, %s21
      %s31 = scalar_select %p28, %s30, %s21
      %p32 = scmp.ge.s32.totalorder %s31, 2
      %s33 = scalar_select %p32, 0, %s31
      %s34 = ssub.s32 %s21, %s33
      %s35 = ssub.s32 %s22, %s29
      %s36 = sor.u32 %s34, %s35
      %p37 = scmp.eq.s32.totalorder %s36, 0
      %s39 = sadd.s32 %s38, 1
      %s40 = scalar_select %p37, %s38, %s39
      %p43 = pneg %p37
      %p44 = scmp.eq.s32.totalorder %s14, 1
      %p45 = por %p43, %p44
      %p46 = scmp.ne.s32.totalorder %s38, %s41
      %p47 = scmp.eq.s32.totalorder %s14, 0
      %p48 = por %p46, %p47
      %p49 = scmp.ne.s32.totalorder %s38, %s41
      %p50 = scmp.eq.s32.totalorder %s19, 1
      %p51 = por %p49, %p50
      %p52 = scmp.ne.s32.totalorder %s41, %s42
      %p53 = scmp.eq.s32.totalorder %s19, 0
      %p54 = por %p52, %p53
      %p55 = scmp.ne.s32.totalorder %s41, %s42
      %p56 = scmp.eq.s32.totalorder %s20, 1
      %p57 = por %p55, %p56
      %p59 = scmp.ne.s32.totalorder %s42, %s58
      %p60 = scmp.eq.s32.totalorder %s20, 0
      %p61 = por %p59, %p60
      %s62 = ssub.s32 %s21, %s33
      %p63 = scmp.eq.s32.totalorder %s62, 0
      %s65 = sadd.s32 %s64, 1
      %s66 = scalar_select %p63, %s64, %s65
      %p69 = pneg %p63
      %p70 = scmp.eq.s32.totalorder %s14, 1
      %p71 = por %p69, %p70
      %p72 = scmp.ne.s32.totalorder %s64, %s67
      %p73 = scmp.eq.s32.totalorder %s14, 0
      %p74 = por %p72, %p73
      %p75 = scmp.ne.s32.totalorder %s64, %s67
      %p76 = scmp.eq.s32.totalorder %s19, 1
      %p77 = por %p75, %p76
      %p78 = scmp.ne.s32.totalorder %s67, %s68
      %p79 = scmp.eq.s32.totalorder %s19, 0
      %p80 = por %p78, %p79
      %p81 = scmp.ne.s32.totalorder %s67, %s68
      %p82 = scmp.eq.s32.totalorder %s20, 1
      %p83 = por %p81, %p82
      %p85 = scmp.ne.s32.totalorder %s68, %s84
      %p86 = scmp.eq.s32.totalorder %s20, 0
      %p87 = por %p85, %p86
      %s88 = ssub.s32 %s21, %s33
      %p89 = scmp.eq.s32.totalorder %s88, 0
      %s91 = sadd.s32 %s90, 1
      %s92 = scalar_select %p89, %s90, %s91
      %p95 = pneg %p89
      %p96 = scmp.eq.s32.totalorder %s14, 1
      %p97 = por %p95, %p96
      %p98 = scmp.ne.s32.totalorder %s90, %s93
      %p99 = scmp.eq.s32.totalorder %s14, 0
      %p100 = por %p98, %p99
      %p101 = scmp.ne.s32.totalorder %s90, %s93
      %p102 = scmp.eq.s32.totalorder %s19, 1
      %p103 = por %p101, %p102
      %p104 = scmp.ne.s32.totalorder %s93, %s94
      %p105 = scmp.eq.s32.totalorder %s19, 0
      %p106 = por %p104, %p105
      %p107 = scmp.ne.s32.totalorder %s93, %s94
      %p108 = scmp.eq.s32.totalorder %s20, 1
      %p109 = por %p107, %p108
      %p111 = scmp.ne.s32.totalorder %s94, %s110
      %p112 = scmp.eq.s32.totalorder %s20, 0
      %p113 = por %p111, %p112
      %s114 = ssub.s32 %s21, %s33
      %s115 = ssub.s32 %s22, %s29
      %s116 = sor.u32 %s114, %s115
      %p117 = scmp.eq.s32.totalorder %s116, 0
      %s119 = sadd.s32 %s118, 1
      %s120 = scalar_select %p117, %s118, %s119
      %p123 = pneg %p117
      %p124 = scmp.eq.s32.totalorder %s14, 1
      %p125 = por %p123, %p124
      %p126 = scmp.ne.s32.totalorder %s118, %s121
      %p127 = scmp.eq.s32.totalorder %s14, 0
      %p128 = por %p126, %p127
      %p129 = scmp.ne.s32.totalorder %s118, %s121
      %p130 = scmp.eq.s32.totalorder %s19, 1
      %p131 = por %p129, %p130
      %p132 = scmp.ne.s32.totalorder %s121, %s122
      %p133 = scmp.eq.s32.totalorder %s19, 0
      %p134 = por %p132, %p133
      %p135 = scmp.ne.s32.totalorder %s121, %s122
      %p136 = scmp.eq.s32.totalorder %s20, 1
      %p137 = por %p135, %p136
      %p139 = scmp.ne.s32.totalorder %s122, %s138
      %p140 = scmp.eq.s32.totalorder %s20, 0
      %p141 = por %p139, %p140
      %s142 = ssub.s32 %s21, %s33
      %s143 = ssub.s32 %s22, %s29
      %s144 = sor.u32 %s142, %s143
      %p145 = scmp.eq.s32.totalorder %s144, 0
      %s147 = sadd.s32 %s146, 1
      %s148 = scalar_select %p145, %s146, %s147
      %p151 = pneg %p145
      %p152 = scmp.eq.s32.totalorder %s14, 1
      %p153 = por %p151, %p152
      %p154 = scmp.ne.s32.totalorder %s146, %s149
      %p155 = scmp.eq.s32.totalorder %s14, 0
      %p156 = por %p154, %p155
      %p157 = scmp.ne.s32.totalorder %s146, %s149
      %p158 = scmp.eq.s32.totalorder %s19, 1
      %p159 = por %p157, %p158
      %p160 = scmp.ne.s32.totalorder %s149, %s150
      %p161 = scmp.eq.s32.totalorder %s19, 0
      %p162 = por %p160, %p161
      %p163 = scmp.ne.s32.totalorder %s149, %s150
      %p164 = scmp.eq.s32.totalorder %s20, 1
      %p165 = por %p163, %p164
      %p167 = scmp.ne.s32.totalorder %s150, %s166
      %p168 = scmp.eq.s32.totalorder %s20, 0
      %p169 = por %p167, %p168
      %p170 = scmp.le.s32.totalorder 1, %s14
      %p171 = scmp.lt.s32.totalorder %s14, 3
      %p172 = pnand %p170, %p171
      %p173 = pneg %p172
      // Predicated region
      $region9: #{scaled_dot_product_attention.1} parent=5 // pred_check
        _
      $region10: #{scaled_dot_product_attention.1} parent=5 // pred_check_branch
        %175 = sbr.rel (%p172) target = $region12
      $region11: #{scaled_dot_product_attention.1} parent=5 // pred_region
        %s176 = ssub.s32 %s14, 1
      $region12: #{scaled_dot_product_attention.1} parent=5 // pred_fallthru
        _
      %p177 = scmp.lt.s32.totalorder %s14, 2
      // Predicated region
      $region13: #{scaled_dot_product_attention.1} parent=5 // pred_check
        %p178 = pneg %p177
      $region14: #{scaled_dot_product_attention.1} parent=5 // pred_check_branch
        %180 = sbr.rel (%p178) target = $region16
      $region15: #{scaled_dot_product_attention.1} parent=5 // pred_region
        // Predicated region
        $region17: #{scaled_dot_product_attention.1} parent=15 // pred_check
          %p181 = pneg %p48
        $region18: #{scaled_dot_product_attention.1} parent=15 // pred_check_branch
          %183 = sbr.rel (%p181) target = $region20
        $region19: #{scaled_dot_product_attention.1} parent=15 // pred_region
          %s184 = smul.u32 4, %s21
          %s185 = smul.u32 16, %s22
          %p186 = scmp.lt.s32.totalorder %s184, 7
          %s187 = scalar_select %p186, %s184, 7
          %p188 = scmp.lt.s32.totalorder %s185, 15
          %s189 = scalar_select %p188, %s185, 15
          %s190 = smul.addr %s187, 16
          %s191 = sadd.s32 %s189, %s190
          %s192 = smul.addr %s191, 8
          %s193 = scalar_lea.vmem %s0, %s192
          %s194 = smul.u32 4, %s21
          %s195 = smul.u32 16, %s22
        $region20: #{scaled_dot_product_attention.1} parent=15 // pred_fallthru
          _
        // Predicated region
        $region21: #{scaled_dot_product_attention.1} parent=15 // pred_check
          %p196 = pneg %p74
        $region22: #{scaled_dot_product_attention.1} parent=15 // pred_check_branch
          %198 = sbr.rel (%p196) target = $region24
        $region23: #{scaled_dot_product_attention.1} parent=15 // pred_region
          %s199 = smul.u32 4, %s21
          %p200 = scmp.lt.s32.totalorder %s199, 7
          %s201 = scalar_select %p200, %s199, 7
          %s202 = smul.addr %s201, 16
          %s203 = smul.addr %s202, 8
          %s204 = scalar_lea.vmem %s1, %s203
          %s205 = smul.u32 4, %s21
        $region24: #{scaled_dot_product_attention.1} parent=15 // pred_fallthru
          _
        // Predicated region
        $region25: #{scaled_dot_product_attention.1} parent=15 // pred_check
          %p206 = pneg %p100
        $region26: #{scaled_dot_product_attention.1} parent=15 // pred_check_branch
          %208 = sbr.rel (%p206) target = $region28
        $region27: #{scaled_dot_product_attention.1} parent=15 // pred_region
          %s209 = smul.u32 4, %s21
          %p210 = scmp.lt.s32.totalorder %s209, 7
          %s211 = scalar_select %p210, %s209, 7
          %s212 = smul.addr %s211, 16
          %s213 = smul.addr %s212, 8
          %s214 = scalar_lea.vmem %s2, %s213
          %s215 = smul.u32 4, %s21
        $region28: #{scaled_dot_product_attention.1} parent=15 // pred_fallthru
          _
      $region16: #{scaled_dot_product_attention.1} parent=5 // pred_fallthru
        _
      %p216 = scmp.le.s32.totalorder 1, %s14
      %p217 = scmp.lt.s32.totalorder %s14, 3
      %p218 = pnand %p216, %p217
      %p219 = pneg %p218
      // Predicated region
      $region29: #{scaled_dot_product_attention.1} parent=5 // pred_check
        _
      $region30: #{scaled_dot_product_attention.1} parent=5 // pred_check_branch
        %221 = sbr.rel (%p218) target = $region32
      $region31: #{scaled_dot_product_attention.1} parent=5 // pred_region
        %s222 = ssub.s32 %s14, 1
        %s223 = smul.u32 4, %s23
        %s224 = smul.u32 16, %s24
        %p225 = scmp.lt.s32.totalorder %s223, 7
        %s226 = scalar_select %p225, %s223, 7
        %p227 = scmp.lt.s32.totalorder %s224, 15
        %s228 = scalar_select %p227, %s224, 15
        %s229 = smul.addr %s226, 16
        %s230 = sadd.s32 %s228, %s229
        %s231 = smul.addr %s230, 8
        %s232 = scalar_lea.vmem %s0, %s231
        %p233 = pneg %p54
        %p234 = pneg %p51
        %s235 = smul.u32 4, %s23
        %p236 = scmp.lt.s32.totalorder %s235, 7
        %s237 = scalar_select %p236, %s235, 7
        %s238 = smul.addr %s237, 16
        %s239 = smul.addr %s238, 8
        %s240 = scalar_lea.vmem %s1, %s239
        %p241 = pneg %p80
        %p242 = pneg %p77
        %s243 = smul.u32 4, %s23
        %p244 = scmp.lt.s32.totalorder %s243, 7
        %s245 = scalar_select %p244, %s243, 7
        %s246 = smul.addr %s245, 16
        %s247 = smul.addr %s246, 8
        %s248 = scalar_lea.vmem %s2, %s247
        %p249 = pneg %p106
        %p250 = pneg %p103
        %p251 = pneg %p134
        %p252 = pneg %p131
        %s253 = smul.u32 4, %s23
        %s254 = smul.u32 16, %s24
        %p255 = scmp.lt.s32.totalorder %s253, 7
        %s256 = scalar_select %p255, %s253, 7
        %p257 = scmp.lt.s32.totalorder %s254, 15
        %s258 = scalar_select %p257, %s254, 15
        %s259 = smul.addr %s256, 16
        %s260 = sadd.s32 %s258, %s259
        %s261 = smul.addr %s260, 8
        %s262 = scalar_lea.vmem %s3, %s261
        %p263 = pneg %p162
        %p264 = pneg %p159
        %s265 = sand.u32 %s149, 1
        %s266 = scalar_lea.sflag [#allocation3], %s265
        %s267 = sand.u32 %s149, 1
        %s268 = smul.addr %s267, 512
        %s269 = scalar_lea.vmem [#allocation2], %s268
        %s270 = smul.u32 4, %s23
        %s271 = smul.u32 16, %s24
        %p272 = scmp.lt.s32.totalorder %s270, 7
        %s273 = scalar_select %p272, %s270, 7
        %p274 = scmp.lt.s32.totalorder %s271, 15
        %s275 = scalar_select %p274, %s271, 15
        %s276 = smul.addr %s273, 16
        %s277 = sadd.s32 %s275, %s276
        %s278 = smul.addr %s277, 8
        %s279 = scalar_lea.vmem %s0, %s278
        %s280 = smul.u32 4, %s23
        %s281 = smul.u32 16, %s24
        %s282 = smul.u32 4, %s23
        %p283 = scmp.lt.s32.totalorder %s282, 7
        %s284 = scalar_select %p283, %s282, 7
        %s285 = smul.addr %s284, 16
        %s286 = smul.addr %s285, 8
        %s287 = scalar_lea.vmem %s1, %s286
        %s288 = smul.u32 4, %s23
        %s289 = smul.u32 4, %s23
        %p290 = scmp.lt.s32.totalorder %s289, 7
        %s291 = scalar_select %p290, %s289, 7
        %s292 = smul.addr %s291, 16
        %s293 = smul.addr %s292, 8
        %s294 = scalar_lea.vmem %s2, %s293
        %s295 = smul.u32 4, %s23
        %s296 = smul.u32 4, %s23
        %s297 = smul.u32 16, %s24
        %p298 = scmp.lt.s32.totalorder %s296, 7
        %s299 = scalar_select %p298, %s296, 7
        %p300 = scmp.lt.s32.totalorder %s297, 15
        %s301 = scalar_select %p300, %s297, 15
        %s302 = smul.addr %s299, 16
        %s303 = sadd.s32 %s301, %s302
        %s304 = smul.addr %s303, 8
        %s305 = scalar_lea.vmem %s3, %s304
        %s306 = smul.u32 4, %s23
        %s307 = smul.u32 16, %s24
        %s308 = smul.u32 4, %s23
        %s309 = smul.u32 16, %s24
        %v310 = vld [vmem:[%s287] sm:$0xff]
        %v311 = vld [vmem:[%s287 + $0x8] sm:$0xff]
        %v312 = vld [vmem:[%s287 + $0x10] sm:$0xff]
        %v313 = vld [vmem:[%s287 + $0x18] sm:$0xff]
        %v314 = vld [vmem:[%s287 + $0x20] sm:$0xff]
        %v315 = vld [vmem:[%s287 + $0x28] sm:$0xff]
        %v316 = vld [vmem:[%s287 + $0x30] sm:$0xff]
        %v317 = vld [vmem:[%s287 + $0x38] sm:$0xff]
        %v318 = vld [vmem:[%s287 + $0x40] sm:$0xff]
        %v319 = vld [vmem:[%s287 + $0x48] sm:$0xff]
        %v320 = vld [vmem:[%s287 + $0x50] sm:$0xff]
        %v321 = vld [vmem:[%s287 + $0x58] sm:$0xff]
        %v322 = vld [vmem:[%s287 + $0x60] sm:$0xff]
        %v323 = vld [vmem:[%s287 + $0x68] sm:$0xff]
        %v324 = vld [vmem:[%s287 + $0x70] sm:$0xff]
        %v325 = vld [vmem:[%s287 + $0x78] sm:$0xff]
        %v326 = vld [vmem:[%s287 + $0x80] sm:$0xff]
        %v327 = vld [vmem:[%s287 + $0x88] sm:$0xff]
        %v328 = vld [vmem:[%s287 + $0x90] sm:$0xff]
        %v329 = vld [vmem:[%s287 + $0x98] sm:$0xff]
        %v330 = vld [vmem:[%s287 + $0xa0] sm:$0xff]
        %v331 = vld [vmem:[%s287 + $0xa8] sm:$0xff]
        %v332 = vld [vmem:[%s287 + $0xb0] sm:$0xff]
        %v333 = vld [vmem:[%s287 + $0xb8] sm:$0xff]
        %v334 = vld [vmem:[%s287 + $0xc0] sm:$0xff]
        %v335 = vld [vmem:[%s287 + $0xc8] sm:$0xff]
        %v336 = vld [vmem:[%s287 + $0xd0] sm:$0xff]
        %v337 = vld [vmem:[%s287 + $0xd8] sm:$0xff]
        %v338 = vld [vmem:[%s287 + $0xe0] sm:$0xff]
        %v339 = vld [vmem:[%s287 + $0xe8] sm:$0xff]
        %v340 = vld [vmem:[%s287 + $0xf0] sm:$0xff]
        %v341 = vld [vmem:[%s287 + $0xf8] sm:$0xff]
        %v342 = vld [vmem:[%s287 + $0x100] sm:$0xff]
        %v343 = vld [vmem:[%s287 + $0x108] sm:$0xff]
        %v344 = vld [vmem:[%s287 + $0x110] sm:$0xff]
        %v345 = vld [vmem:[%s287 + $0x118] sm:$0xff]
        %v346 = vld [vmem:[%s287 + $0x120] sm:$0xff]
        %v347 = vld [vmem:[%s287 + $0x128] sm:$0xff]
        %v348 = vld [vmem:[%s287 + $0x130] sm:$0xff]
        %v349 = vld [vmem:[%s287 + $0x138] sm:$0xff]
        %v350 = vld [vmem:[%s287 + $0x140] sm:$0xff]
        %v351 = vld [vmem:[%s287 + $0x148] sm:$0xff]
        %v352 = vld [vmem:[%s287 + $0x150] sm:$0xff]
        %v353 = vld [vmem:[%s287 + $0x158] sm:$0xff]
        %v354 = vld [vmem:[%s287 + $0x160] sm:$0xff]
        %v355 = vld [vmem:[%s287 + $0x168] sm:$0xff]
        %v356 = vld [vmem:[%s287 + $0x170] sm:$0xff]
        %v357 = vld [vmem:[%s287 + $0x178] sm:$0xff]
        %v358 = vld [vmem:[%s287 + $0x180] sm:$0xff]
        %v359 = vld [vmem:[%s287 + $0x188] sm:$0xff]
        %v360 = vld [vmem:[%s287 + $0x190] sm:$0xff]
        %v361 = vld [vmem:[%s287 + $0x198] sm:$0xff]
        %v362 = vld [vmem:[%s287 + $0x1a0] sm:$0xff]
        %v363 = vld [vmem:[%s287 + $0x1a8] sm:$0xff]
        %v364 = vld [vmem:[%s287 + $0x1b0] sm:$0xff]
        %v365 = vld [vmem:[%s287 + $0x1b8] sm:$0xff]
        %v366 = vld [vmem:[%s287 + $0x1c0] sm:$0xff]
        %v367 = vld [vmem:[%s287 + $0x1c8] sm:$0xff]
        %v368 = vld [vmem:[%s287 + $0x1d0] sm:$0xff]
        %v369 = vld [vmem:[%s287 + $0x1d8] sm:$0xff]
        %v370 = vld [vmem:[%s287 + $0x1e0] sm:$0xff]
        %v371 = vld [vmem:[%s287 + $0x1e8] sm:$0xff]
        %v372 = vld [vmem:[%s287 + $0x1f0] sm:$0xff]
        %v373 = vld [vmem:[%s287 + $0x1f8] sm:$0xff]
        %v374 = vld [vmem:[%s294] sm:$0xff]
        %v375 = vld [vmem:[%s294 + $0x8] sm:$0xff]
        %v376 = vld [vmem:[%s294 + $0x10] sm:$0xff]
        %v377 = vld [vmem:[%s294 + $0x18] sm:$0xff]
        %v378 = vld [vmem:[%s294 + $0x20] sm:$0xff]
        %v379 = vld [vmem:[%s294 + $0x28] sm:$0xff]
        %v380 = vld [vmem:[%s294 + $0x30] sm:$0xff]
        %v381 = vld [vmem:[%s294 + $0x38] sm:$0xff]
        %v382 = vld [vmem:[%s294 + $0x40] sm:$0xff]
        %v383 = vld [vmem:[%s294 + $0x48] sm:$0xff]
        %v384 = vld [vmem:[%s294 + $0x50] sm:$0xff]
        %v385 = vld [vmem:[%s294 + $0x58] sm:$0xff]
        %v386 = vld [vmem:[%s294 + $0x60] sm:$0xff]
        %v387 = vld [vmem:[%s294 + $0x68] sm:$0xff]
        %v388 = vld [vmem:[%s294 + $0x70] sm:$0xff]
        %v389 = vld [vmem:[%s294 + $0x78] sm:$0xff]
        %v390 = vld [vmem:[%s294 + $0x80] sm:$0xff]
        %v391 = vld [vmem:[%s294 + $0x88] sm:$0xff]
        %v392 = vld [vmem:[%s294 + $0x90] sm:$0xff]
        %v393 = vld [vmem:[%s294 + $0x98] sm:$0xff]
        %v394 = vld [vmem:[%s294 + $0xa0] sm:$0xff]
        %v395 = vld [vmem:[%s294 + $0xa8] sm:$0xff]
        %v396 = vld [vmem:[%s294 + $0xb0] sm:$0xff]
        %v397 = vld [vmem:[%s294 + $0xb8] sm:$0xff]
        %v398 = vld [vmem:[%s294 + $0xc0] sm:$0xff]
        %v399 = vld [vmem:[%s294 + $0xc8] sm:$0xff]
        %v400 = vld [vmem:[%s294 + $0xd0] sm:$0xff]
        %v401 = vld [vmem:[%s294 + $0xd8] sm:$0xff]
        %v402 = vld [vmem:[%s294 + $0xe0] sm:$0xff]
        %v403 = vld [vmem:[%s294 + $0xe8] sm:$0xff]
        %v404 = vld [vmem:[%s294 + $0xf0] sm:$0xff]
        %v405 = vld [vmem:[%s294 + $0xf8] sm:$0xff]
        %v406 = vld [vmem:[%s294 + $0x100] sm:$0xff]
        %v407 = vld [vmem:[%s294 + $0x108] sm:$0xff]
        %v408 = vld [vmem:[%s294 + $0x110] sm:$0xff]
        %v409 = vld [vmem:[%s294 + $0x118] sm:$0xff]
        %v410 = vld [vmem:[%s294 + $0x120] sm:$0xff]
        %v411 = vld [vmem:[%s294 + $0x128] sm:$0xff]
        %v412 = vld [vmem:[%s294 + $0x130] sm:$0xff]
        %v413 = vld [vmem:[%s294 + $0x138] sm:$0xff]
        %v414 = vld [vmem:[%s294 + $0x140] sm:$0xff]
        %v415 = vld [vmem:[%s294 + $0x148] sm:$0xff]
        %v416 = vld [vmem:[%s294 + $0x150] sm:$0xff]
        %v417 = vld [vmem:[%s294 + $0x158] sm:$0xff]
        %v418 = vld [vmem:[%s294 + $0x160] sm:$0xff]
        %v419 = vld [vmem:[%s294 + $0x168] sm:$0xff]
        %v420 = vld [vmem:[%s294 + $0x170] sm:$0xff]
        %v421 = vld [vmem:[%s294 + $0x178] sm:$0xff]
        %v422 = vld [vmem:[%s294 + $0x180] sm:$0xff]
        %v423 = vld [vmem:[%s294 + $0x188] sm:$0xff]
        %v424 = vld [vmem:[%s294 + $0x190] sm:$0xff]
        %v425 = vld [vmem:[%s294 + $0x198] sm:$0xff]
        %v426 = vld [vmem:[%s294 + $0x1a0] sm:$0xff]
        %v427 = vld [vmem:[%s294 + $0x1a8] sm:$0xff]
        %v428 = vld [vmem:[%s294 + $0x1b0] sm:$0xff]
        %v429 = vld [vmem:[%s294 + $0x1b8] sm:$0xff]
        %v430 = vld [vmem:[%s294 + $0x1c0] sm:$0xff]
        %v431 = vld [vmem:[%s294 + $0x1c8] sm:$0xff]
        %v432 = vld [vmem:[%s294 + $0x1d0] sm:$0xff]
        %v433 = vld [vmem:[%s294 + $0x1d8] sm:$0xff]
        %v434 = vld [vmem:[%s294 + $0x1e0] sm:$0xff]
        %v435 = vld [vmem:[%s294 + $0x1e8] sm:$0xff]
        %v436 = vld [vmem:[%s294 + $0x1f0] sm:$0xff]
        %v437 = vld [vmem:[%s294 + $0x1f8] sm:$0xff]
        %v438 = vld [vmem:[%s279] sm:$0xff]
        %v439 = vld [vmem:[%s279 + $0x8] sm:$0xff]
        %v440 = vld [vmem:[%s279 + $0x10] sm:$0xff]
        %v441 = vld [vmem:[%s279 + $0x18] sm:$0xff]
        %v442 = vld [vmem:[%s279 + $0x20] sm:$0xff]
        %v443 = vld [vmem:[%s279 + $0x28] sm:$0xff]
        %v444 = vld [vmem:[%s279 + $0x30] sm:$0xff]
        %v445 = vld [vmem:[%s279 + $0x38] sm:$0xff]
        %v446 = vld [vmem:[%s279 + $0x40] sm:$0xff]
        %v447 = vld [vmem:[%s279 + $0x48] sm:$0xff]
        %v448 = vld [vmem:[%s279 + $0x50] sm:$0xff]
        %v449 = vld [vmem:[%s279 + $0x58] sm:$0xff]
        %v450 = vld [vmem:[%s279 + $0x60] sm:$0xff]
        %v451 = vld [vmem:[%s279 + $0x68] sm:$0xff]
        %v452 = vld [vmem:[%s279 + $0x70] sm:$0xff]
        %v453 = vld [vmem:[%s279 + $0x78] sm:$0xff]
        %v454 = vld [vmem:[%s279 + $0x80] sm:$0xff]
        %v455 = vld [vmem:[%s279 + $0x88] sm:$0xff]
        %v456 = vld [vmem:[%s279 + $0x90] sm:$0xff]
        %v457 = vld [vmem:[%s279 + $0x98] sm:$0xff]
        %v458 = vld [vmem:[%s279 + $0xa0] sm:$0xff]
        %v459 = vld [vmem:[%s279 + $0xa8] sm:$0xff]
        %v460 = vld [vmem:[%s279 + $0xb0] sm:$0xff]
        %v461 = vld [vmem:[%s279 + $0xb8] sm:$0xff]
        %v462 = vld [vmem:[%s279 + $0xc0] sm:$0xff]
        %v463 = vld [vmem:[%s279 + $0xc8] sm:$0xff]
        %v464 = vld [vmem:[%s279 + $0xd0] sm:$0xff]
        %v465 = vld [vmem:[%s279 + $0xd8] sm:$0xff]
        %v466 = vld [vmem:[%s279 + $0xe0] sm:$0xff]
        %v467 = vld [vmem:[%s279 + $0xe8] sm:$0xff]
        %v468 = vld [vmem:[%s279 + $0xf0] sm:$0xff]
        %v469 = vld [vmem:[%s279 + $0xf8] sm:$0xff]
        %v470 = vld [vmem:[%s279 + $0x100] sm:$0xff]
        %v471 = vld [vmem:[%s279 + $0x108] sm:$0xff]
        %v472 = vld [vmem:[%s279 + $0x110] sm:$0xff]
        %v473 = vld [vmem:[%s279 + $0x118] sm:$0xff]
        %v474 = vld [vmem:[%s279 + $0x120] sm:$0xff]
        %v475 = vld [vmem:[%s279 + $0x128] sm:$0xff]
        %v476 = vld [vmem:[%s279 + $0x130] sm:$0xff]
        %v477 = vld [vmem:[%s279 + $0x138] sm:$0xff]
        %v478 = vld [vmem:[%s279 + $0x140] sm:$0xff]
        %v479 = vld [vmem:[%s279 + $0x148] sm:$0xff]
        %v480 = vld [vmem:[%s279 + $0x150] sm:$0xff]
        %v481 = vld [vmem:[%s279 + $0x158] sm:$0xff]
        %v482 = vld [vmem:[%s279 + $0x160] sm:$0xff]
        %v483 = vld [vmem:[%s279 + $0x168] sm:$0xff]
        %v484 = vld [vmem:[%s279 + $0x170] sm:$0xff]
        %v485 = vld [vmem:[%s279 + $0x178] sm:$0xff]
        %v486 = vld [vmem:[%s279 + $0x180] sm:$0xff]
        %v487 = vld [vmem:[%s279 + $0x188] sm:$0xff]
        %v488 = vld [vmem:[%s279 + $0x190] sm:$0xff]
        %v489 = vld [vmem:[%s279 + $0x198] sm:$0xff]
        %v490 = vld [vmem:[%s279 + $0x1a0] sm:$0xff]
        %v491 = vld [vmem:[%s279 + $0x1a8] sm:$0xff]
        %v492 = vld [vmem:[%s279 + $0x1b0] sm:$0xff]
        %v493 = vld [vmem:[%s279 + $0x1b8] sm:$0xff]
        %v494 = vld [vmem:[%s279 + $0x1c0] sm:$0xff]
        %v495 = vld [vmem:[%s279 + $0x1c8] sm:$0xff]
        %v496 = vld [vmem:[%s279 + $0x1d0] sm:$0xff]
        %v497 = vld [vmem:[%s279 + $0x1d8] sm:$0xff]
        %v498 = vld [vmem:[%s279 + $0x1e0] sm:$0xff]
        %v499 = vld [vmem:[%s279 + $0x1e8] sm:$0xff]
        %v500 = vld [vmem:[%s279 + $0x1f0] sm:$0xff]
        %v501 = vld [vmem:[%s279 + $0x1f8] sm:$0xff]
        %v502 = vmul.f32 %v438, 0.125
        %v503 = vmul.f32 %v439, 0.125
        %v504 = vmul.f32 %v440, 0.125
        %v505 = vmul.f32 %v441, 0.125
        %v506 = vmul.f32 %v442, 0.125
        %v507 = vmul.f32 %v443, 0.125
        %v508 = vmul.f32 %v444, 0.125
        %v509 = vmul.f32 %v445, 0.125
        %v510 = vmul.f32 %v446, 0.125
        %v511 = vmul.f32 %v447, 0.125
        %v512 = vmul.f32 %v448, 0.125
        %v513 = vmul.f32 %v449, 0.125
        %v514 = vmul.f32 %v450, 0.125
        %v515 = vmul.f32 %v451, 0.125
        %v516 = vmul.f32 %v452, 0.125
        %v517 = vmul.f32 %v453, 0.125
        %v518 = vmul.f32 %v454, 0.125
        %v519 = vmul.f32 %v455, 0.125
        %v520 = vmul.f32 %v456, 0.125
        %v521 = vmul.f32 %v457, 0.125
        %v522 = vmul.f32 %v458, 0.125
        %v523 = vmul.f32 %v459, 0.125
        %v524 = vmul.f32 %v460, 0.125
        %v525 = vmul.f32 %v461, 0.125
        %v526 = vmul.f32 %v462, 0.125
        %v527 = vmul.f32 %v463, 0.125
        %v528 = vmul.f32 %v464, 0.125
        %v529 = vmul.f32 %v465, 0.125
        %v530 = vmul.f32 %v466, 0.125
        %v531 = vmul.f32 %v467, 0.125
        %v532 = vmul.f32 %v468, 0.125
        %v533 = vmul.f32 %v469, 0.125
        %v534 = vmul.f32 %v470, 0.125
        %v535 = vmul.f32 %v471, 0.125
        %v536 = vmul.f32 %v472, 0.125
        %v537 = vmul.f32 %v473, 0.125
        %v538 = vmul.f32 %v474, 0.125
        %v539 = vmul.f32 %v475, 0.125
        %v540 = vmul.f32 %v476, 0.125
        %v541 = vmul.f32 %v477, 0.125
        %v542 = vmul.f32 %v478, 0.125
        %v543 = vmul.f32 %v479, 0.125
        %v544 = vmul.f32 %v480, 0.125
        %v545 = vmul.f32 %v481, 0.125
        %v546 = vmul.f32 %v482, 0.125
        %v547 = vmul.f32 %v483, 0.125
        %v548 = vmul.f32 %v484, 0.125
        %v549 = vmul.f32 %v485, 0.125
        %v550 = vmul.f32 %v486, 0.125
        %v551 = vmul.f32 %v487, 0.125
        %v552 = vmul.f32 %v488, 0.125
        %v553 = vmul.f32 %v489, 0.125
        %v554 = vmul.f32 %v490, 0.125
        %v555 = vmul.f32 %v491, 0.125
        %v556 = vmul.f32 %v492, 0.125
        %v557 = vmul.f32 %v493, 0.125
        %v558 = vmul.f32 %v494, 0.125
        %v559 = vmul.f32 %v495, 0.125
        %v560 = vmul.f32 %v496, 0.125
        %v561 = vmul.f32 %v497, 0.125
        %v562 = vmul.f32 %v498, 0.125
        %v563 = vmul.f32 %v499, 0.125
        %v564 = vmul.f32 %v500, 0.125
        %v565 = vmul.f32 %v501, 0.125
        %vm566 = vcmask 523264
        %v568 = vsel %vm566, %v502, 0
        %v571 = vsel %vm566, %v503, 0
        %v574 = vsel %vm566, %v504, 0
        %v577 = vsel %vm566, %v505, 0
        %v580 = vsel %vm566, %v506, 0
        %v583 = vsel %vm566, %v507, 0
        %v586 = vsel %vm566, %v508, 0
        %v589 = vsel %vm566, %v509, 0
        %v592 = vsel %vm566, %v510, 0
        %v595 = vsel %vm566, %v511, 0
        %v598 = vsel %vm566, %v512, 0
        %v601 = vsel %vm566, %v513, 0
        %v604 = vsel %vm566, %v514, 0
        %v607 = vsel %vm566, %v515, 0
        %v610 = vsel %vm566, %v516, 0
        %v613 = vsel %vm566, %v517, 0
        %v616 = vsel %vm566, %v310, 0
        %v619 = vsel %vm566, %v311, 0
        %v622 = vsel %vm566, %v312, 0
        %v625 = vsel %vm566, %v313, 0
        %v628 = vsel %vm566, %v314, 0
        %v631 = vsel %vm566, %v315, 0
        %v634 = vsel %vm566, %v316, 0
        %v637 = vsel %vm566, %v317, 0
        %v640 = vsel %vm566, %v318, 0
        %v643 = vsel %vm566, %v319, 0
        %v646 = vsel %vm566, %v320, 0
        %v649 = vsel %vm566, %v321, 0
        %v652 = vsel %vm566, %v322, 0
        %v655 = vsel %vm566, %v323, 0
        %v658 = vsel %vm566, %v324, 0
        %v661 = vsel %vm566, %v325, 0
        %663 = vmatprep.subr.mxu0 0.0
        %664 = vmatpush1.xpose.msra.mxu0 %v616
        %665 = vmatprep.subr.mxu0 0.0
        %666 = vmatpush1.xpose.msra.mxu0 %v619
        %667 = vmatprep.subr.mxu0 0.0
        %668 = vmatpush1.xpose.msra.mxu0 %v622
        %669 = vmatprep.subr.mxu0 0.0
        %670 = vmatpush1.xpose.msra.mxu0 %v625
        %671 = vmatprep.subr.mxu0 0.0
        %672 = vmatpush1.xpose.msra.mxu0 %v628
        %673 = vmatprep.subr.mxu0 0.0
        %674 = vmatpush1.xpose.msra.mxu0 %v631
        %675 = vmatprep.subr.mxu0 0.0
        %676 = vmatpush1.xpose.msra.mxu0 %v634
        %677 = vmatprep.subr.mxu0 0.0
        %678 = vmatpush1.xpose.msra.mxu0 %v637
        %679 = vmatprep.subr.mxu0 0.0
        %680 = vmatpush1.xpose.msra.mxu0 %v640
        %681 = vmatprep.subr.mxu0 0.0
        %682 = vmatpush1.xpose.msra.mxu0 %v643
        %683 = vmatprep.subr.mxu0 0.0
        %684 = vmatpush1.xpose.msra.mxu0 %v646
        %685 = vmatprep.subr.mxu0 0.0
        %686 = vmatpush1.xpose.msra.mxu0 %v649
        %687 = vmatprep.subr.mxu0 0.0
        %688 = vmatpush1.xpose.msra.mxu0 %v652
        %689 = vmatprep.subr.mxu0 0.0
        %690 = vmatpush1.xpose.msra.mxu0 %v655
        %691 = vmatprep.subr.mxu0 0.0
        %692 = vmatpush1.xpose.msra.mxu0 %v658
        %693 = vmatprep.subr.mxu0 0.0
        %694 = vmatpush1.xpose.msra.mxu0 %v661
        %695 = vmatprep.subr.mxu0 0.0
        %696 = vmatpush1.xpose.msra.mxu0 0.0
        %697 = vmatprep.subr.mxu0 0.0
        %698 = vmatpush1.xpose.msra.mxu0 0.0
        %699 = vmatprep.subr.mxu0 0.0
        %700 = vmatpush1.xpose.msra.mxu0 0.0
        %701 = vmatprep.subr.mxu0 0.0
        %702 = vmatpush1.xpose.msra.mxu0 0.0
        %703 = vmatprep.subr.mxu0 0.0
        %704 = vmatpush1.xpose.msra.mxu0 0.0
        %705 = vmatprep.subr.mxu0 0.0
        %706 = vmatpush1.xpose.msra.mxu0 0.0
        %707 = vmatprep.subr.mxu0 0.0
        %708 = vmatpush1.xpose.msra.mxu0 0.0
        %709 = vmatprep.subr.mxu0 0.0
        %710 = vmatpush1.xpose.msra.mxu0 0.0
        %711 = vmatprep.subr.mxu0 0.0
        %712 = vmatpush1.xpose.msra.mxu0 0.0
        %713 = vmatprep.subr.mxu0 0.0
        %714 = vmatpush1.xpose.msra.mxu0 0.0
        %715 = vmatprep.subr.mxu0 0.0
        %716 = vmatpush1.xpose.msra.mxu0 0.0
        %717 = vmatprep.subr.mxu0 0.0
        %718 = vmatpush1.xpose.msra.mxu0 0.0
        %719 = vmatprep.subr.mxu0 0.0
        %720 = vmatpush1.xpose.msra.mxu0 0.0
        %721 = vmatprep.subr.mxu0 0.0
        %722 = vmatpush1.xpose.msra.mxu0 0.0
        %723 = vmatprep.subr.mxu0 0.0
        %724 = vmatpush1.xpose.msra.mxu0 0.0
        %725 = vmatprep.subr.mxu0 0.0
        %726 = vmatpush1.xpose.msra.mxu0 0.0
        %727 = vmatprep.mubr.f32.mxu0 0.0
        %728 = vmatmul.mubr.f32.gmra.mrb[0].mxu0 %v568
        %v729 = vpop.f32.mrb[0].mxu0
        %v730 = vadd.f32 0.0, %v729
        %v731 = vpop.f32.mrb[0].mxu0
        %732 = vmatprep.mubr.f32.mxu0 0.0
        %733 = vmatmul.mubr.f32.gmra.mrb[0].mxu0 %v571
        %v734 = vpop.f32.mrb[0].mxu0
        %v735 = vadd.f32 0.0, %v734
        %v736 = vpop.f32.mrb[0].mxu0
        %737 = vmatprep.mubr.f32.mxu0 0.0
        %738 = vmatmul.mubr.f32.gmra.mrb[0].mxu0 %v574
        %v739 = vpop.f32.mrb[0].mxu0
        %v740 = vadd.f32 0.0, %v739
        %v741 = vpop.f32.mrb[0].mxu0
        %742 = vmatprep.mubr.f32.mxu0 0.0
        %743 = vmatmul.mubr.f32.gmra.mrb[0].mxu0 %v577
        %v744 = vpop.f32.mrb[0].mxu0
        %v745 = vadd.f32 0.0, %v744
        %v746 = vpop.f32.mrb[0].mxu0
        %747 = vmatprep.mubr.f32.mxu0 0.0
        %748 = vmatmul.mubr.f32.gmra.mrb[0].mxu0 %v580
        %v749 = vpop.f32.mrb[0].mxu0
        %v750 = vadd.f32 0.0, %v749
        %v751 = vpop.f32.mrb[0].mxu0
        %752 = vmatprep.mubr.f32.mxu0 0.0
        %753 = vmatmul.mubr.f32.gmra.mrb[0].mxu0 %v583
        %v754 = vpop.f32.mrb[0].mxu0
        %v755 = vadd.f32 0.0, %v754
        %v756 = vpop.f32.mrb[0].mxu0
        %757 = vmatprep.mubr.f32.mxu0 0.0
        %758 = vmatmul.mubr.f32.gmra.mrb[0].mxu0 %v586
        %v759 = vpop.f32.mrb[0].mxu0
        %v760 = vadd.f32 0.0, %v759
        %v761 = vpop.f32.mrb[0].mxu0
        %762 = vmatprep.mubr.f32.mxu0 0.0
        %763 = vmatmul.mubr.f32.gmra.mrb[0].mxu0 %v589
        %v764 = vpop.f32.mrb[0].mxu0
        %v765 = vadd.f32 0.0, %v764
        %v766 = vpop.f32.mrb[0].mxu0
        %767 = vmatprep.mubr.f32.mxu0 0.0
        %768 = vmatmul.mubr.f32.gmra.mrb[0].mxu0 %v592
        %v769 = vpop.f32.mrb[0].mxu0
        %v770 = vadd.f32 0.0, %v769
        %v771 = vpop.f32.mrb[0].mxu0
        %772 = vmatprep.mubr.f32.mxu0 0.0
        %773 = vmatmul.mubr.f32.gmra.mrb[0].mxu0 %v595
        %v774 = vpop.f32.mrb[0].mxu0
        %v775 = vadd.f32 0.0, %v774
        %v776 = vpop.f32.mrb[0].mxu0
        %777 = vmatprep.mubr.f32.mxu0 0.0
        %778 = vmatmul.mubr.f32.gmra.mrb[0].mxu0 %v598
        %v779 = vpop.f32.mrb[0].mxu0
        %v780 = vadd.f32 0.0, %v779
        %v781 = vpop.f32.mrb[0].mxu0
        %782 = vmatprep.mubr.f32.mxu0 0.0
        %783 = vmatmul.mubr.f32.gmra.mrb[0].mxu0 %v601
        %v784 = vpop.f32.mrb[0].mxu0
        %v785 = vadd.f32 0.0, %v784
        %v786 = vpop.f32.mrb[0].mxu0
        %787 = vmatprep.mubr.f32.mxu0 0.0
        %788 = vmatmul.mubr.f32.gmra.mrb[0].mxu0 %v604
        %v789 = vpop.f32.mrb[0].mxu0
        %v790 = vadd.f32 0.0, %v789
        %v791 = vpop.f32.mrb[0].mxu0
        %792 = vmatprep.mubr.f32.mxu0 0.0
        %793 = vmatmul.mubr.f32.gmra.mrb[0].mxu0 %v607
        %v794 = vpop.f32.mrb[0].mxu0
        %v795 = vadd.f32 0.0, %v794
        %v796 = vpop.f32.mrb[0].mxu0
        %797 = vmatprep.mubr.f32.mxu0 0.0
        %798 = vmatmul.mubr.f32.gmra.mrb[0].mxu0 %v610
        %v799 = vpop.f32.mrb[0].mxu0
        %v800 = vadd.f32 0.0, %v799
        %v801 = vpop.f32.mrb[0].mxu0
        %802 = vmatprep.mubr.f32.mxu0 0.0
        %803 = vmatmul.mubr.f32.gmra.mrb[0].mxu0 %v613
        %v804 = vpop.f32.mrb[0].mxu0
        %v805 = vadd.f32 0.0, %v804
        %v806 = vpop.f32.mrb[0].mxu0
        %807 = vdwg.mxu0
        %v809 = vsel %vm566, %v518, 0
        %v812 = vsel %vm566, %v519, 0
        %v815 = vsel %vm566, %v520, 0
        %v818 = vsel %vm566, %v521, 0
        %v821 = vsel %vm566, %v522, 0
        %v824 = vsel %vm566, %v523, 0
        %v827 = vsel %vm566, %v524, 0
        %v830 = vsel %vm566, %v525, 0
        %v833 = vsel %vm566, %v526, 0
        %v836 = vsel %vm566, %v527, 0
        %v839 = vsel %vm566, %v528, 0
        %v842 = vsel %vm566, %v529, 0
        %v845 = vsel %vm566, %v530, 0
        %v848 = vsel %vm566, %v531, 0
        %v851 = vsel %vm566, %v532, 0
        %v854 = vsel %vm566, %v533, 0
        %v857 = vsel %vm566, %v326, 0
        %v860 = vsel %vm566, %v327, 0
        %v863 = vsel %vm566, %v328, 0
        %v866 = vsel %vm566, %v329, 0
        %v869 = vsel %vm566, %v330, 0
        %v872 = vsel %vm566, %v331, 0
        %v875 = vsel %vm566, %v332, 0
        %v878 = vsel %vm566, %v333, 0
        %v881 = vsel %vm566, %v334, 0
        %v884 = vsel %vm566, %v335, 0
        %v887 = vsel %vm566, %v336, 0
        %v890 = vsel %vm566, %v337, 0
        %v893 = vsel %vm566, %v338, 0
        %v896 = vsel %vm566, %v339, 0
        %v899 = vsel %vm566, %v340, 0
        %v902 = vsel %vm566, %v341, 0
        %904 = vmatprep.subr.mxu0 0.0
        %905 = vmatpush1.xpose.msra.mxu0 %v857
        %906 = vmatprep.subr.mxu0 0.0
        %907 = vmatpush1.xpose.msra.mxu0 %v860
        %908 = vmatprep.subr.mxu0 0.0
        %909 = vmatpush1.xpose.msra.mxu0 %v863
        %910 = vmatprep.subr.mxu0 0.0
        %911 = vmatpush1.xpose.msra.mxu0 %v866
        %912 = vmatprep.subr.mxu0 0.0
        %913 = vmatpush1.xpose.msra.mxu0 %v869
        %914 = vmatprep.subr.mxu0 0.0
        %915 = vmatpush1.xpose.msra.mxu0 %v872
        %916 = vmatprep.subr.mxu0 0.0
        %917 = vmatpush1.xpose.msra.mxu0 %v875
        %918 = vmatprep.subr.mxu0 0.0
        %919 = vmatpush1.xpose.msra.mxu0 %v878
        %920 = vmatprep.subr.mxu0 0.0
        %921 = vmatpush1.xpose.msra.mxu0 %v881
        %922 = vmatprep.subr.mxu0 0.0
        %923 = vmatpush1.xpose.msra.mxu0 %v884
        %924 = vmatprep.subr.mxu0 0.0
        %925 = vmatpush1.xpose.msra.mxu0 %v887
        %926 = vmatprep.subr.mxu0 0.0
        %927 = vmatpush1.xpose.msra.mxu0 %v890
        %928 = vmatprep.subr.mxu0 0.0
        %929 = vmatpush1.xpose.msra.mxu0 %v893
        %930 = vmatprep.subr.mxu0 0.0
        %931 = vmatpush1.xpose.msra.mxu0 %v896
        %932 = vmatprep.subr.mxu0 0.0
        %933 = vmatpush1.xpose.msra.mxu0 %v899
        %934 = vmatprep.subr.mxu0 0.0
        %935 = vmatpush1.xpose.msra.mxu0 %v902
        %936 = vmatprep.subr.mxu0 0.0
        %937 = vmatpush1.xpose.msra.mxu0 0.0
        %938 = vmatprep.subr.mxu0 0.0
        %939 = vmatpush1.xpose.msra.mxu0 0.0
        %940 = vmatprep.subr.mxu0 0.0
        %941 = vmatpush1.xpose.msra.mxu0 0.0
        %942 = vmatprep.subr.mxu0 0.0
        %943 = vmatpush1.xpose.msra.mxu0 0.0
        %944 = vmatprep.subr.mxu0 0.0
        %945 = vmatpush1.xpose.msra.mxu0 0.0
        %946 = vmatprep.subr.mxu0 0.0
        %947 = vmatpush1.xpose.msra.mxu0 0.0
        %948 = vmatprep.subr.mxu0 0.0
        %949 = vmatpush1.xpose.msra.mxu0 0.0
        %950 = vmatprep.subr.mxu0 0.0
        %951 = vmatpush1.xpose.msra.mxu0 0.0
        %952 = vmatprep.subr.mxu0 0.0
        %953 = vmatpush1.xpose.msra.mxu0 0.0
        %954 = vmatprep.subr.mxu0 0.0
        %955 = vmatpush1.xpose.msra.mxu0 0.0
        %956 = vmatprep.subr.mxu0 0.0
        %957 = vmatpush1.xpose.msra.mxu0 0.0
        %958 = vmatprep.subr.mxu0 0.0
        %959 = vmatpush1.xpose.msra.mxu0 0.0
        %960 = vmatprep.subr.mxu0 0.0
        %961 = vmatpush1.xpose.msra.mxu0 0.0
        %962 = vmatprep.subr.mxu0 0.0
        %963 = vmatpush1.xpose.msra.mxu0 0.0
        %964 = vmatprep.subr.mxu0 0.0
        %965 = vmatpush1.xpose.msra.mxu0 0.0
        %966 = vmatprep.subr.mxu0 0.0
        %967 = vmatpush1.xpose.msra.mxu0 0.0
        %968 = vmatprep.mubr.f32.mxu0 0.0
        %969 = vmatmul.mubr.f32.gmra.mrb[0].mxu0 %v809
        %v970 = vpop.f32.mrb[0].mxu0
        %v971 = vadd.f32 0.0, %v970
        %v972 = vpop.f32.mrb[0].mxu0
        %973 = vmatprep.mubr.f32.mxu0 0.0
        %974 = vmatmul.mubr.f32.gmra.mrb[0].mxu0 %v812
        %v975 = vpop.f32.mrb[0].mxu0
        %v976 = vadd.f32 0.0, %v975
        %v977 = vpop.f32.mrb[0].mxu0
        %978 = vmatprep.mubr.f32.mxu0 0.0
        %979 = vmatmul.mubr.f32.gmra.mrb[0].mxu0 %v815
        %v980 = vpop.f32.mrb[0].mxu0
        %v981 = vadd.f32 0.0, %v980
        %v982 = vpop.f32.mrb[0].mxu0
        %983 = vmatprep.mubr.f32.mxu0 0.0
        %984 = vmatmul.mubr.f32.gmra.mrb[0].mxu0 %v818
        %v985 = vpop.f32.mrb[0].mxu0
        %v986 = vadd.f32 0.0, %v985
        %v987 = vpop.f32.mrb[0].mxu0
        %988 = vmatprep.mubr.f32.mxu0 0.0
        %989 = vmatmul.mubr.f32.gmra.mrb[0].mxu0 %v821
        %v990 = vpop.f32.mrb[0].mxu0
        %v991 = vadd.f32 0.0, %v990
        %v992 = vpop.f32.mrb[0].mxu0
        %993 = vmatprep.mubr.f32.mxu0 0.0
        %994 = vmatmul.mubr.f32.gmra.mrb[0].mxu0 %v824
        %v995 = vpop.f32.mrb[0].mxu0
        %v996 = vadd.f32 0.0, %v995
        %v997 = vpop.f32.mrb[0].mxu0
        %998 = vmatprep.mubr.f32.mxu0 0.0
        %999 = vmatmul.mubr.f32.gmra.mrb[0].mxu0 %v827
        %v1000 = vpop.f32.mrb[0].mxu0
        %v1001 = vadd.f32 0.0, %v1000
        %v1002 = vpop.f32.mrb[0].mxu0
        %1003 = vmatprep.mubr.f32.mxu0 0.0
        %1004 = vmatmul.mubr.f32.gmra.mrb[0].mxu0 %v830
        %v1005 = vpop.f32.mrb[0].mxu0
        %v1006 = vadd.f32 0.0, %v1005
        %v1007 = vpop.f32.mrb[0].mxu0
        %1008 = vmatprep.mubr.f32.mxu0 0.0
        %1009 = vmatmul.mubr.f32.gmra.mrb[0].mxu0 %v833
        %v1010 = vpop.f32.mrb[0].mxu0
        %v1011 = vadd.f32 0.0, %v1010
        %v1012 = vpop.f32.mrb[0].mxu0
        %1013 = vmatprep.mubr.f32.mxu0 0.0
        %1014 = vmatmul.mubr.f32.gmra.mrb[0].mxu0 %v836
        %v1015 = vpop.f32.mrb[0].mxu0
        %v1016 = vadd.f32 0.0, %v1015
        %v1017 = vpop.f32.mrb[0].mxu0
        %1018 = vmatprep.mubr.f32.mxu0 0.0
        %1019 = vmatmul.mubr.f32.gmra.mrb[0].mxu0 %v839
        %v1020 = vpop.f32.mrb[0].mxu0
        %v1021 = vadd.f32 0.0, %v1020
        %v1022 = vpop.f32.mrb[0].mxu0
        %1023 = vmatprep.mubr.f32.mxu0 0.0
        %1024 = vmatmul.mubr.f32.gmra.mrb[0].mxu0 %v842
        %v1025 = vpop.f32.mrb[0].mxu0
        %v1026 = vadd.f32 0.0, %v1025
        %v1027 = vpop.f32.mrb[0].mxu0
        %1028 = vmatprep.mubr.f32.mxu0 0.0
        %1029 = vmatmul.mubr.f32.gmra.mrb[0].mxu0 %v845
        %v1030 = vpop.f32.mrb[0].mxu0
        %v1031 = vadd.f32 0.0, %v1030
        %v1032 = vpop.f32.mrb[0].mxu0
        %1033 = vmatprep.mubr.f32.mxu0 0.0
        %1034 = vmatmul.mubr.f32.gmra.mrb[0].mxu0 %v848
        %v1035 = vpop.f32.mrb[0].mxu0
        %v1036 = vadd.f32 0.0, %v1035
        %v1037 = vpop.f32.mrb[0].mxu0
        %1038 = vmatprep.mubr.f32.mxu0 0.0
        %1039 = vmatmul.mubr.f32.gmra.mrb[0].mxu0 %v851
        %v1040 = vpop.f32.mrb[0].mxu0
        %v1041 = vadd.f32 0.0, %v1040
        %v1042 = vpop.f32.mrb[0].mxu0
        %1043 = vmatprep.mubr.f32.mxu0 0.0
        %1044 = vmatmul.mubr.f32.gmra.mrb[0].mxu0 %v854
        %v1045 = vpop.f32.mrb[0].mxu0
        %v1046 = vadd.f32 0.0, %v1045
        %v1047 = vpop.f32.mrb[0].mxu0
        %1048 = vdwg.mxu0
        %v1050 = vsel %vm566, %v534, 0
        %v1053 = vsel %vm566, %v535, 0
        %v1056 = vsel %vm566, %v536, 0
        %v1059 = vsel %vm566, %v537, 0
        %v1062 = vsel %vm566, %v538, 0
        %v1065 = vsel %vm566, %v539, 0
        %v1068 = vsel %vm566, %v540, 0
        %v1071 = vsel %vm566, %v541, 0
        %v1074 = vsel %vm566, %v542, 0
        %v1077 = vsel %vm566, %v543, 0
        %v1080 = vsel %vm566, %v544, 0
        %v1083 = vsel %vm566, %v545, 0
        %v1086 = vsel %vm566, %v546, 0
        %v1089 = vsel %vm566, %v547, 0
        %v1092 = vsel %vm566, %v548, 0
        %v1095 = vsel %vm566, %v549, 0
        %v1098 = vsel %vm566, %v342, 0
        %v1101 = vsel %vm566, %v343, 0
        %v1104 = vsel %vm566, %v344, 0
        %v1107 = vsel %vm566, %v345, 0
        %v1110 = vsel %vm566, %v346, 0
        %v1113 = vsel %vm566, %v347, 0
        %v1116 = vsel %vm566, %v348, 0
        %v1119 = vsel %vm566, %v349, 0
        %v1122 = vsel %vm566, %v350, 0
        %v1125 = vsel %vm566, %v351, 0
        %v1128 = vsel %vm566, %v352, 0
        %v1131 = vsel %vm566, %v353, 0
        %v1134 = vsel %vm566, %v354, 0
        %v1137 = vsel %vm566, %v355, 0
        %v1140 = vsel %vm566, %v356, 0
        %v1143 = vsel %vm566, %v357, 0
        %1145 = vmatprep.subr.mxu0 0.0
        %1146 = vmatpush1.xpose.msra.mxu0 %v1098
        %1147 = vmatprep.subr.mxu0 0.0
        %1148 = vmatpush1.xpose.msra.mxu0 %v1101
        %1149 = vmatprep.subr.mxu0 0.0
        %1150 = vmatpush1.xpose.msra.mxu0 %v1104
        %1151 = vmatprep.subr.mxu0 0.0
        %1152 = vmatpush1.xpose.msra.mxu0 %v1107
        %1153 = vmatprep.subr.mxu0 0.0
        %1154 = vmatpush1.xpose.msra.mxu0 %v1110
        %1155 = vmatprep.subr.mxu0 0.0
        %1156 = vmatpush1.xpose.msra.mxu0 %v1113
        %1157 = vmatprep.subr.mxu0 0.0
        %1158 = vmatpush1.xpose.msra.mxu0 %v1116
        %1159 = vmatprep.subr.mxu0 0.0
        %1160 = vmatpush1.xpose.msra.mxu0 %v1119
        %1161 = vmatprep.subr.mxu0 0.0
        %1162 = vmatpush1.xpose.msra.mxu0 %v1122
        %1163 = vmatprep.subr.mxu0 0.0
        %1164 = vmatpush1.xpose.msra.mxu0 %v1125
        %1165 = vmatprep.subr.mxu0 0.0
        %1166 = vmatpush1.xpose.msra.mxu0 %v1128
        %1167 = vmatprep.subr.mxu0 0.0
        %1168 = vmatpush1.xpose.msra.mxu0 %v1131
        %1169 = vmatprep.subr.mxu0 0.0
        %1170 = vmatpush1.xpose.msra.mxu0 %v1134
        %1171 = vmatprep.subr.mxu0 0.0
        %1172 = vmatpush1.xpose.msra.mxu0 %v1137
        %1173 = vmatprep.subr.mxu0 0.0
        %1174 = vmatpush1.xpose.msra.mxu0 %v1140
        %1175 = vmatprep.subr.mxu0 0.0
        %1176 = vmatpush1.xpose.msra.mxu0 %v1143
        %1177 = vmatprep.subr.mxu0 0.0
        %1178 = vmatpush1.xpose.msra.mxu0 0.0
        %1179 = vmatprep.subr.mxu0 0.0
        %1180 = vmatpush1.xpose.msra.mxu0 0.0
        %1181 = vmatprep.subr.mxu0 0.0
        %1182 = vmatpush1.xpose.msra.mxu0 0.0
        %1183 = vmatprep.subr.mxu0 0.0
        %1184 = vmatpush1.xpose.msra.mxu0 0.0
        %1185 = vmatprep.subr.mxu0 0.0
        %1186 = vmatpush1.xpose.msra.mxu0 0.0
        %1187 = vmatprep.subr.mxu0 0.0
        %1188 = vmatpush1.xpose.msra.mxu0 0.0
        %1189 = vmatprep.subr.mxu0 0.0
        %1190 = vmatpush1.xpose.msra.mxu0 0.0
        %1191 = vmatprep.subr.mxu0 0.0
        %1192 = vmatpush1.xpose.msra.mxu0 0.0
        %1193 = vmatprep.subr.mxu0 0.0
        %1194 = vmatpush1.xpose.msra.mxu0 0.0
        %1195 = vmatprep.subr.mxu0 0.0
        %1196 = vmatpush1.xpose.msra.mxu0 0.0
        %1197 = vmatprep.subr.mxu0 0.0
        %1198 = vmatpush1.xpose.msra.mxu0 0.0
        %1199 = vmatprep.subr.mxu0 0.0
        %1200 = vmatpush1.xpose.msra.mxu0 0.0
        %1201 = vmatprep.subr.mxu0 0.0
        %1202 = vmatpush1.xpose.msra.mxu0 0.0
        %1203 = vmatprep.subr.mxu0 0.0
        %1204 = vmatpush1.xpose.msra.mxu0 0.0
        %1205 = vmatprep.subr.mxu0 0.0
        %1206 = vmatpush1.xpose.msra.mxu0 0.0
        %1207 = vmatprep.subr.mxu0 0.0
        %1208 = vmatpush1.xpose.msra.mxu0 0.0
        %1209 = vmatprep.mubr.f32.mxu0 0.0
        %1210 = vmatmul.mubr.f32.gmra.mrb[0].mxu0 %v1050
        %v1211 = vpop.f32.mrb[0].mxu0
        %v1212 = vadd.f32 0.0, %v1211
        %v1213 = vpop.f32.mrb[0].mxu0
        %1214 = vmatprep.mubr.f32.mxu0 0.0
        %1215 = vmatmul.mubr.f32.gmra.mrb[0].mxu0 %v1053
        %v1216 = vpop.f32.mrb[0].mxu0
        %v1217 = vadd.f32 0.0, %v1216
        %v1218 = vpop.f32.mrb[0].mxu0
        %1219 = vmatprep.mubr.f32.mxu0 0.0
        %1220 = vmatmul.mubr.f32.gmra.mrb[0].mxu0 %v1056
        %v1221 = vpop.f32.mrb[0].mxu0
        %v1222 = vadd.f32 0.0, %v1221
        %v1223 = vpop.f32.mrb[0].mxu0
        %1224 = vmatprep.mubr.f32.mxu0 0.0
        %1225 = vmatmul.mubr.f32.gmra.mrb[0].mxu0 %v1059
        %v1226 = vpop.f32.mrb[0].mxu0
        %v1227 = vadd.f32 0.0, %v1226
        %v1228 = vpop.f32.mrb[0].mxu0
        %1229 = vmatprep.mubr.f32.mxu0 0.0
        %1230 = vmatmul.mubr.f32.gmra.mrb[0].mxu0 %v1062
        %v1231 = vpop.f32.mrb[0].mxu0
        %v1232 = vadd.f32 0.0, %v1231
        %v1233 = vpop.f32.mrb[0].mxu0
        %1234 = vmatprep.mubr.f32.mxu0 0.0
        %1235 = vmatmul.mubr.f32.gmra.mrb[0].mxu0 %v1065
        %v1236 = vpop.f32.mrb[0].mxu0
        %v1237 = vadd.f32 0.0, %v1236
        %v1238 = vpop.f32.mrb[0].mxu0
        %1239 = vmatprep.mubr.f32.mxu0 0.0
        %1240 = vmatmul.mubr.f32.gmra.mrb[0].mxu0 %v1068
        %v1241 = vpop.f32.mrb[0].mxu0
        %v1242 = vadd.f32 0.0, %v1241
        %v1243 = vpop.f32.mrb[0].mxu0
        %1244 = vmatprep.mubr.f32.mxu0 0.0
        %1245 = vmatmul.mubr.f32.gmra.mrb[0].mxu0 %v1071
        %v1246 = vpop.f32.mrb[0].mxu0
        %v1247 = vadd.f32 0.0, %v1246
        %v1248 = vpop.f32.mrb[0].mxu0
        %1249 = vmatprep.mubr.f32.mxu0 0.0
        %1250 = vmatmul.mubr.f32.gmra.mrb[0].mxu0 %v1074
        %v1251 = vpop.f32.mrb[0].mxu0
        %v1252 = vadd.f32 0.0, %v1251
        %v1253 = vpop.f32.mrb[0].mxu0
        %1254 = vmatprep.mubr.f32.mxu0 0.0
        %1255 = vmatmul.mubr.f32.gmra.mrb[0].mxu0 %v1077
        %v1256 = vpop.f32.mrb[0].mxu0
        %v1257 = vadd.f32 0.0, %v1256
        %v1258 = vpop.f32.mrb[0].mxu0
        %1259 = vmatprep.mubr.f32.mxu0 0.0
        %1260 = vmatmul.mubr.f32.gmra.mrb[0].mxu0 %v1080
        %v1261 = vpop.f32.mrb[0].mxu0
        %v1262 = vadd.f32 0.0, %v1261
        %v1263 = vpop.f32.mrb[0].mxu0
        %1264 = vmatprep.mubr.f32.mxu0 0.0
        %1265 = vmatmul.mubr.f32.gmra.mrb[0].mxu0 %v1083
        %v1266 = vpop.f32.mrb[0].mxu0
        %v1267 = vadd.f32 0.0, %v1266
        %v1268 = vpop.f32.mrb[0].mxu0
        %1269 = vmatprep.mubr.f32.mxu0 0.0
        %1270 = vmatmul.mubr.f32.gmra.mrb[0].mxu0 %v1086
        %v1271 = vpop.f32.mrb[0].mxu0
        %v1272 = vadd.f32 0.0, %v1271
        %v1273 = vpop.f32.mrb[0].mxu0
        %1274 = vmatprep.mubr.f32.mxu0 0.0
        %1275 = vmatmul.mubr.f32.gmra.mrb[0].mxu0 %v1089
        %v1276 = vpop.f32.mrb[0].mxu0
        %v1277 = vadd.f32 0.0, %v1276
        %v1278 = vpop.f32.mrb[0].mxu0
        %1279 = vmatprep.mubr.f32.mxu0 0.0
        %1280 = vmatmul.mubr.f32.gmra.mrb[0].mxu0 %v1092
        %v1281 = vpop.f32.mrb[0].mxu0
        %v1282 = vadd.f32 0.0, %v1281
        %v1283 = vpop.f32.mrb[0].mxu0
        %1284 = vmatprep.mubr.f32.mxu0 0.0
        %1285 = vmatmul.mubr.f32.gmra.mrb[0].mxu0 %v1095
        %v1286 = vpop.f32.mrb[0].mxu0
        %v1287 = vadd.f32 0.0, %v1286
        %v1288 = vpop.f32.mrb[0].mxu0
        %1289 = vdwg.mxu0
        %v1291 = vsel %vm566, %v550, 0
        %v1294 = vsel %vm566, %v551, 0
        %v1297 = vsel %vm566, %v552, 0
        %v1300 = vsel %vm566, %v553, 0
        %v1303 = vsel %vm566, %v554, 0
        %v1306 = vsel %vm566, %v555, 0
        %v1309 = vsel %vm566, %v556, 0
        %v1312 = vsel %vm566, %v557, 0
        %v1315 = vsel %vm566, %v558, 0
        %v1318 = vsel %vm566, %v559, 0
        %v1321 = vsel %vm566, %v560, 0
        %v1324 = vsel %vm566, %v561, 0
        %v1327 = vsel %vm566, %v562, 0
        %v1330 = vsel %vm566, %v563, 0
        %v1333 = vsel %vm566, %v564, 0
        %v1336 = vsel %vm566, %v565, 0
        %v1339 = vsel %vm566, %v358, 0
        %v1342 = vsel %vm566, %v359, 0
        %v1345 = vsel %vm566, %v360, 0
        %v1348 = vsel %vm566, %v361, 0
        %v1351 = vsel %vm566, %v362, 0
        %v1354 = vsel %vm566, %v363, 0
        %v1357 = vsel %vm566, %v364, 0
        %v1360 = vsel %vm566, %v365, 0
        %v1363 = vsel %vm566, %v366, 0
        %v1366 = vsel %vm566, %v367, 0
        %v1369 = vsel %vm566, %v368, 0
        %v1372 = vsel %vm566, %v369, 0
        %v1375 = vsel %vm566, %v370, 0
        %v1378 = vsel %vm566, %v371, 0
        %v1381 = vsel %vm566, %v372, 0
        %v1384 = vsel %vm566, %v373, 0
        %1386 = vmatprep.subr.mxu0 0.0
        %1387 = vmatpush1.xpose.msra.mxu0 %v1339
        %1388 = vmatprep.subr.mxu0 0.0
        %1389 = vmatpush1.xpose.msra.mxu0 %v1342
        %1390 = vmatprep.subr.mxu0 0.0
        %1391 = vmatpush1.xpose.msra.mxu0 %v1345
        %1392 = vmatprep.subr.mxu0 0.0
        %1393 = vmatpush1.xpose.msra.mxu0 %v1348
        %1394 = vmatprep.subr.mxu0 0.0
        %1395 = vmatpush1.xpose.msra.mxu0 %v1351
        %1396 = vmatprep.subr.mxu0 0.0
        %1397 = vmatpush1.xpose.msra.mxu0 %v1354
        %1398 = vmatprep.subr.mxu0 0.0
        %1399 = vmatpush1.xpose.msra.mxu0 %v1357
        %1400 = vmatprep.subr.mxu0 0.0
        %1401 = vmatpush1.xpose.msra.mxu0 %v1360
        %1402 = vmatprep.subr.mxu0 0.0
        %1403 = vmatpush1.xpose.msra.mxu0 %v1363
        %1404 = vmatprep.subr.mxu0 0.0
        %1405 = vmatpush1.xpose.msra.mxu0 %v1366
        %1406 = vmatprep.subr.mxu0 0.0
        %1407 = vmatpush1.xpose.msra.mxu0 %v1369
        %1408 = vmatprep.subr.mxu0 0.0
        %1409 = vmatpush1.xpose.msra.mxu0 %v1372
        %1410 = vmatprep.subr.mxu0 0.0
        %1411 = vmatpush1.xpose.msra.mxu0 %v1375
        %1412 = vmatprep.subr.mxu0 0.0
        %1413 = vmatpush1.xpose.msra.mxu0 %v1378
        %1414 = vmatprep.subr.mxu0 0.0
        %1415 = vmatpush1.xpose.msra.mxu0 %v1381
        %1416 = vmatprep.subr.mxu0 0.0
        %1417 = vmatpush1.xpose.msra.mxu0 %v1384
        %1418 = vmatprep.subr.mxu0 0.0
        %1419 = vmatpush1.xpose.msra.mxu0 0.0
        %1420 = vmatprep.subr.mxu0 0.0
        %1421 = vmatpush1.xpose.msra.mxu0 0.0
        %1422 = vmatprep.subr.mxu0 0.0
        %1423 = vmatpush1.xpose.msra.mxu0 0.0
        %1424 = vmatprep.subr.mxu0 0.0
        %1425 = vmatpush1.xpose.msra.mxu0 0.0
        %1426 = vmatprep.subr.mxu0 0.0
        %1427 = vmatpush1.xpose.msra.mxu0 0.0
        %1428 = vmatprep.subr.mxu0 0.0
        %1429 = vmatpush1.xpose.msra.mxu0 0.0
        %1430 = vmatprep.subr.mxu0 0.0
        %1431 = vmatpush1.xpose.msra.mxu0 0.0
        %1432 = vmatprep.subr.mxu0 0.0
        %1433 = vmatpush1.xpose.msra.mxu0 0.0
        %1434 = vmatprep.subr.mxu0 0.0
        %1435 = vmatpush1.xpose.msra.mxu0 0.0
        %1436 = vmatprep.subr.mxu0 0.0
        %1437 = vmatpush1.xpose.msra.mxu0 0.0
        %1438 = vmatprep.subr.mxu0 0.0
        %1439 = vmatpush1.xpose.msra.mxu0 0.0
        %1440 = vmatprep.subr.mxu0 0.0
        %1441 = vmatpush1.xpose.msra.mxu0 0.0
        %1442 = vmatprep.subr.mxu0 0.0
        %1443 = vmatpush1.xpose.msra.mxu0 0.0
        %1444 = vmatprep.subr.mxu0 0.0
        %1445 = vmatpush1.xpose.msra.mxu0 0.0
        %1446 = vmatprep.subr.mxu0 0.0
        %1447 = vmatpush1.xpose.msra.mxu0 0.0
        %1448 = vmatprep.subr.mxu0 0.0
        %1449 = vmatpush1.xpose.msra.mxu0 0.0
        %1450 = vmatprep.mubr.f32.mxu0 0.0
        %1451 = vmatmul.mubr.f32.gmra.mrb[0].mxu0 %v1291
        %v1452 = vpop.f32.mrb[0].mxu0
        %v1453 = vadd.f32 0.0, %v1452
        %v1454 = vpop.f32.mrb[0].mxu0
        %1455 = vmatprep.mubr.f32.mxu0 0.0
        %1456 = vmatmul.mubr.f32.gmra.mrb[0].mxu0 %v1294
        %v1457 = vpop.f32.mrb[0].mxu0
        %v1458 = vadd.f32 0.0, %v1457
        %v1459 = vpop.f32.mrb[0].mxu0
        %1460 = vmatprep.mubr.f32.mxu0 0.0
        %1461 = vmatmul.mubr.f32.gmra.mrb[0].mxu0 %v1297
        %v1462 = vpop.f32.mrb[0].mxu0
        %v1463 = vadd.f32 0.0, %v1462
        %v1464 = vpop.f32.mrb[0].mxu0
        %1465 = vmatprep.mubr.f32.mxu0 0.0
        %1466 = vmatmul.mubr.f32.gmra.mrb[0].mxu0 %v1300
        %v1467 = vpop.f32.mrb[0].mxu0
        %v1468 = vadd.f32 0.0, %v1467
        %v1469 = vpop.f32.mrb[0].mxu0
        %1470 = vmatprep.mubr.f32.mxu0 0.0
        %1471 = vmatmul.mubr.f32.gmra.mrb[0].mxu0 %v1303
        %v1472 = vpop.f32.mrb[0].mxu0
        %v1473 = vadd.f32 0.0, %v1472
        %v1474 = vpop.f32.mrb[0].mxu0
        %1475 = vmatprep.mubr.f32.mxu0 0.0
        %1476 = vmatmul.mubr.f32.gmra.mrb[0].mxu0 %v1306
        %v1477 = vpop.f32.mrb[0].mxu0
        %v1478 = vadd.f32 0.0, %v1477
        %v1479 = vpop.f32.mrb[0].mxu0
        %1480 = vmatprep.mubr.f32.mxu0 0.0
        %1481 = vmatmul.mubr.f32.gmra.mrb[0].mxu0 %v1309
        %v1482 = vpop.f32.mrb[0].mxu0
        %v1483 = vadd.f32 0.0, %v1482
        %v1484 = vpop.f32.mrb[0].mxu0
        %1485 = vmatprep.mubr.f32.mxu0 0.0
        %1486 = vmatmul.mubr.f32.gmra.mrb[0].mxu0 %v1312
        %v1487 = vpop.f32.mrb[0].mxu0
        %v1488 = vadd.f32 0.0, %v1487
        %v1489 = vpop.f32.mrb[0].mxu0
        %1490 = vmatprep.mubr.f32.mxu0 0.0
        %1491 = vmatmul.mubr.f32.gmra.mrb[0].mxu0 %v1315
        %v1492 = vpop.f32.mrb[0].mxu0
        %v1493 = vadd.f32 0.0, %v1492
        %v1494 = vpop.f32.mrb[0].mxu0
        %1495 = vmatprep.mubr.f32.mxu0 0.0
        %1496 = vmatmul.mubr.f32.gmra.mrb[0].mxu0 %v1318
        %v1497 = vpop.f32.mrb[0].mxu0
        %v1498 = vadd.f32 0.0, %v1497
        %v1499 = vpop.f32.mrb[0].mxu0
        %1500 = vmatprep.mubr.f32.mxu0 0.0
        %1501 = vmatmul.mubr.f32.gmra.mrb[0].mxu0 %v1321
        %v1502 = vpop.f32.mrb[0].mxu0
        %v1503 = vadd.f32 0.0, %v1502
        %v1504 = vpop.f32.mrb[0].mxu0
        %1505 = vmatprep.mubr.f32.mxu0 0.0
        %1506 = vmatmul.mubr.f32.gmra.mrb[0].mxu0 %v1324
        %v1507 = vpop.f32.mrb[0].mxu0
        %v1508 = vadd.f32 0.0, %v1507
        %v1509 = vpop.f32.mrb[0].mxu0
        %1510 = vmatprep.mubr.f32.mxu0 0.0
        %1511 = vmatmul.mubr.f32.gmra.mrb[0].mxu0 %v1327
        %v1512 = vpop.f32.mrb[0].mxu0
        %v1513 = vadd.f32 0.0, %v1512
        %v1514 = vpop.f32.mrb[0].mxu0
        %1515 = vmatprep.mubr.f32.mxu0 0.0
        %1516 = vmatmul.mubr.f32.gmra.mrb[0].mxu0 %v1330
        %v1517 = vpop.f32.mrb[0].mxu0
        %v1518 = vadd.f32 0.0, %v1517
        %v1519 = vpop.f32.mrb[0].mxu0
        %1520 = vmatprep.mubr.f32.mxu0 0.0
        %1521 = vmatmul.mubr.f32.gmra.mrb[0].mxu0 %v1333
        %v1522 = vpop.f32.mrb[0].mxu0
        %v1523 = vadd.f32 0.0, %v1522
        %v1524 = vpop.f32.mrb[0].mxu0
        %1525 = vmatprep.mubr.f32.mxu0 0.0
        %1526 = vmatmul.mubr.f32.gmra.mrb[0].mxu0 %v1336
        %v1527 = vpop.f32.mrb[0].mxu0
        %v1528 = vadd.f32 0.0, %v1527
        %v1529 = vpop.f32.mrb[0].mxu0
        %1530 = vdwg.mxu0
        %1531 = vmax.xlane.f32.xlu0 %v730
        %v1532 = vpop.xlane.xlu0 %1531
        %1533 = vmax.xlane.f32.xlu0 %v735
        %v1534 = vpop.xlane.xlu0 %1533
        %1535 = vmax.xlane.f32.xlu0 %v740
        %v1536 = vpop.xlane.xlu0 %1535
        %1537 = vmax.xlane.f32.xlu0 %v745
        %v1538 = vpop.xlane.xlu0 %1537
        %1539 = vmax.xlane.f32.xlu0 %v750
        %v1540 = vpop.xlane.xlu0 %1539
        %1541 = vmax.xlane.f32.xlu0 %v755
        %v1542 = vpop.xlane.xlu0 %1541
        %1543 = vmax.xlane.f32.xlu0 %v760
        %v1544 = vpop.xlane.xlu0 %1543
        %1545 = vmax.xlane.f32.xlu0 %v765
        %v1546 = vpop.xlane.xlu0 %1545
        %1547 = vmax.xlane.f32.xlu0 %v770
        %v1548 = vpop.xlane.xlu0 %1547
        %1549 = vmax.xlane.f32.xlu0 %v775
        %v1550 = vpop.xlane.xlu0 %1549
        %1551 = vmax.xlane.f32.xlu0 %v780
        %v1552 = vpop.xlane.xlu0 %1551
        %1553 = vmax.xlane.f32.xlu0 %v785
        %v1554 = vpop.xlane.xlu0 %1553
        %1555 = vmax.xlane.f32.xlu0 %v790
        %v1556 = vpop.xlane.xlu0 %1555
        %1557 = vmax.xlane.f32.xlu0 %v795
        %v1558 = vpop.xlane.xlu0 %1557
        %1559 = vmax.xlane.f32.xlu0 %v800
        %v1560 = vpop.xlane.xlu0 %1559
        %1561 = vmax.xlane.f32.xlu0 %v805
        %v1562 = vpop.xlane.xlu0 %1561
        %1563 = vmax.xlane.f32.xlu0 %v971
        %v1564 = vpop.xlane.xlu0 %1563
        %1565 = vmax.xlane.f32.xlu0 %v976
        %v1566 = vpop.xlane.xlu0 %1565
        %1567 = vmax.xlane.f32.xlu0 %v981
        %v1568 = vpop.xlane.xlu0 %1567
        %1569 = vmax.xlane.f32.xlu0 %v986
        %v1570 = vpop.xlane.xlu0 %1569
        %1571 = vmax.xlane.f32.xlu0 %v991
        %v1572 = vpop.xlane.xlu0 %1571
        %1573 = vmax.xlane.f32.xlu0 %v996
        %v1574 = vpop.xlane.xlu0 %1573
        %1575 = vmax.xlane.f32.xlu0 %v1001
        %v1576 = vpop.xlane.xlu0 %1575
        %1577 = vmax.xlane.f32.xlu0 %v1006
        %v1578 = vpop.xlane.xlu0 %1577
        %1579 = vmax.xlane.f32.xlu0 %v1011
        %v1580 = vpop.xlane.xlu0 %1579
        %1581 = vmax.xlane.f32.xlu0 %v1016
        %v1582 = vpop.xlane.xlu0 %1581
        %1583 = vmax.xlane.f32.xlu0 %v1021
        %v1584 = vpop.xlane.xlu0 %1583
        %1585 = vmax.xlane.f32.xlu0 %v1026
        %v1586 = vpop.xlane.xlu0 %1585
        %1587 = vmax.xlane.f32.xlu0 %v1031
        %v1588 = vpop.xlane.xlu0 %1587
        %1589 = vmax.xlane.f32.xlu0 %v1036
        %v1590 = vpop.xlane.xlu0 %1589
        %1591 = vmax.xlane.f32.xlu0 %v1041
        %v1592 = vpop.xlane.xlu0 %1591
        %1593 = vmax.xlane.f32.xlu0 %v1046
        %v1594 = vpop.xlane.xlu0 %1593
        %1595 = vmax.xlane.f32.xlu0 %v1212
        %v1596 = vpop.xlane.xlu0 %1595
        %1597 = vmax.xlane.f32.xlu0 %v1217
        %v1598 = vpop.xlane.xlu0 %1597
        %1599 = vmax.xlane.f32.xlu0 %v1222
        %v1600 = vpop.xlane.xlu0 %1599
        %1601 = vmax.xlane.f32.xlu0 %v1227
        %v1602 = vpop.xlane.xlu0 %1601
        %1603 = vmax.xlane.f32.xlu0 %v1232
        %v1604 = vpop.xlane.xlu0 %1603
        %1605 = vmax.xlane.f32.xlu0 %v1237
        %v1606 = vpop.xlane.xlu0 %1605
        %1607 = vmax.xlane.f32.xlu0 %v1242
        %v1608 = vpop.xlane.xlu0 %1607
        %1609 = vmax.xlane.f32.xlu0 %v1247
        %v1610 = vpop.xlane.xlu0 %1609
        %1611 = vmax.xlane.f32.xlu0 %v1252
        %v1612 = vpop.xlane.xlu0 %1611
        %1613 = vmax.xlane.f32.xlu0 %v1257
        %v1614 = vpop.xlane.xlu0 %1613
        %1615 = vmax.xlane.f32.xlu0 %v1262
        %v1616 = vpop.xlane.xlu0 %1615
        %1617 = vmax.xlane.f32.xlu0 %v1267
        %v1618 = vpop.xlane.xlu0 %1617
        %1619 = vmax.xlane.f32.xlu0 %v1272
        %v1620 = vpop.xlane.xlu0 %1619
        %1621 = vmax.xlane.f32.xlu0 %v1277
        %v1622 = vpop.xlane.xlu0 %1621
        %1623 = vmax.xlane.f32.xlu0 %v1282
        %v1624 = vpop.xlane.xlu0 %1623
        %1625 = vmax.xlane.f32.xlu0 %v1287
        %v1626 = vpop.xlane.xlu0 %1625
        %1627 = vmax.xlane.f32.xlu0 %v1453
        %v1628 = vpop.xlane.xlu0 %1627
        %1629 = vmax.xlane.f32.xlu0 %v1458
        %v1630 = vpop.xlane.xlu0 %1629
        %1631 = vmax.xlane.f32.xlu0 %v1463
        %v1632 = vpop.xlane.xlu0 %1631
        %1633 = vmax.xlane.f32.xlu0 %v1468
        %v1634 = vpop.xlane.xlu0 %1633
        %1635 = vmax.xlane.f32.xlu0 %v1473
        %v1636 = vpop.xlane.xlu0 %1635
        %1637 = vmax.xlane.f32.xlu0 %v1478
        %v1638 = vpop.xlane.xlu0 %1637
        %1639 = vmax.xlane.f32.xlu0 %v1483
        %v1640 = vpop.xlane.xlu0 %1639
        %1641 = vmax.xlane.f32.xlu0 %v1488
        %v1642 = vpop.xlane.xlu0 %1641
        %1643 = vmax.xlane.f32.xlu0 %v1493
        %v1644 = vpop.xlane.xlu0 %1643
        %1645 = vmax.xlane.f32.xlu0 %v1498
        %v1646 = vpop.xlane.xlu0 %1645
        %1647 = vmax.xlane.f32.xlu0 %v1503
        %v1648 = vpop.xlane.xlu0 %1647
        %1649 = vmax.xlane.f32.xlu0 %v1508
        %v1650 = vpop.xlane.xlu0 %1649
        %1651 = vmax.xlane.f32.xlu0 %v1513
        %v1652 = vpop.xlane.xlu0 %1651
        %1653 = vmax.xlane.f32.xlu0 %v1518
        %v1654 = vpop.xlane.xlu0 %1653
        %1655 = vmax.xlane.f32.xlu0 %v1523
        %v1656 = vpop.xlane.xlu0 %1655
        %1657 = vmax.xlane.f32.xlu0 %v1528
        %v1658 = vpop.xlane.xlu0 %1657
        %v1659 = vsub.f32 %v730, %v1532
        %v1660 = vsub.f32 %v735, %v1534
        %v1661 = vsub.f32 %v740, %v1536
        %v1662 = vsub.f32 %v745, %v1538
        %v1663 = vsub.f32 %v750, %v1540
        %v1664 = vsub.f32 %v755, %v1542
        %v1665 = vsub.f32 %v760, %v1544
        %v1666 = vsub.f32 %v765, %v1546
        %v1667 = vsub.f32 %v770, %v1548
        %v1668 = vsub.f32 %v775, %v1550
        %v1669 = vsub.f32 %v780, %v1552
        %v1670 = vsub.f32 %v785, %v1554
        %v1671 = vsub.f32 %v790, %v1556
        %v1672 = vsub.f32 %v795, %v1558
        %v1673 = vsub.f32 %v800, %v1560
        %v1674 = vsub.f32 %v805, %v1562
        %v1675 = vsub.f32 %v971, %v1564
        %v1676 = vsub.f32 %v976, %v1566
        %v1677 = vsub.f32 %v981, %v1568
        %v1678 = vsub.f32 %v986, %v1570
        %v1679 = vsub.f32 %v991, %v1572
        %v1680 = vsub.f32 %v996, %v1574
        %v1681 = vsub.f32 %v1001, %v1576
        %v1682 = vsub.f32 %v1006, %v1578
        %v1683 = vsub.f32 %v1011, %v1580
        %v1684 = vsub.f32 %v1016, %v1582
        %v1685 = vsub.f32 %v1021, %v1584
        %v1686 = vsub.f32 %v1026, %v1586
        %v1687 = vsub.f32 %v1031, %v1588
        %v1688 = vsub.f32 %v1036, %v1590
        %v1689 = vsub.f32 %v1041, %v1592
        %v1690 = vsub.f32 %v1046, %v1594
        %v1691 = vsub.f32 %v1212, %v1596
        %v1692 = vsub.f32 %v1217, %v1598
        %v1693 = vsub.f32 %v1222, %v1600
        %v1694 = vsub.f32 %v1227, %v1602
        %v1695 = vsub.f32 %v1232, %v1604
        %v1696 = vsub.f32 %v1237, %v1606
        %v1697 = vsub.f32 %v1242, %v1608
        %v1698 = vsub.f32 %v1247, %v1610
        %v1699 = vsub.f32 %v1252, %v1612
        %v1700 = vsub.f32 %v1257, %v1614
        %v1701 = vsub.f32 %v1262, %v1616
        %v1702 = vsub.f32 %v1267, %v1618
        %v1703 = vsub.f32 %v1272, %v1620
        %v1704 = vsub.f32 %v1277, %v1622
        %v1705 = vsub.f32 %v1282, %v1624
        %v1706 = vsub.f32 %v1287, %v1626
        %v1707 = vsub.f32 %v1453, %v1628
        %v1708 = vsub.f32 %v1458, %v1630
        %v1709 = vsub.f32 %v1463, %v1632
        %v1710 = vsub.f32 %v1468, %v1634
        %v1711 = vsub.f32 %v1473, %v1636
        %v1712 = vsub.f32 %v1478, %v1638
        %v1713 = vsub.f32 %v1483, %v1640
        %v1714 = vsub.f32 %v1488, %v1642
        %v1715 = vsub.f32 %v1493, %v1644
        %v1716 = vsub.f32 %v1498, %v1646
        %v1717 = vsub.f32 %v1503, %v1648
        %v1718 = vsub.f32 %v1508, %v1650
        %v1719 = vsub.f32 %v1513, %v1652
        %v1720 = vsub.f32 %v1518, %v1654
        %v1721 = vsub.f32 %v1523, %v1656
        %v1722 = vsub.f32 %v1528, %v1658
        %v1723 = vmul.f32 %v1659, 1.442695
        %v1724 = vpow.pop %v1723
        %v1725 = vmul.f32 %v1660, 1.442695
        %v1726 = vpow.pop %v1725
        %v1727 = vmul.f32 %v1661, 1.442695
        %v1728 = vpow.pop %v1727
        %v1729 = vmul.f32 %v1662, 1.442695
        %v1730 = vpow.pop %v1729
        %v1731 = vmul.f32 %v1663, 1.442695
        %v1732 = vpow.pop %v1731
        %v1733 = vmul.f32 %v1664, 1.442695
        %v1734 = vpow.pop %v1733
        %v1735 = vmul.f32 %v1665, 1.442695
        %v1736 = vpow.pop %v1735
        %v1737 = vmul.f32 %v1666, 1.442695
        %v1738 = vpow.pop %v1737
        %v1739 = vmul.f32 %v1667, 1.442695
        %v1740 = vpow.pop %v1739
        %v1741 = vmul.f32 %v1668, 1.442695
        %v1742 = vpow.pop %v1741
        %v1743 = vmul.f32 %v1669, 1.442695
        %v1744 = vpow.pop %v1743
        %v1745 = vmul.f32 %v1670, 1.442695
        %v1746 = vpow.pop %v1745
        %v1747 = vmul.f32 %v1671, 1.442695
        %v1748 = vpow.pop %v1747
        %v1749 = vmul.f32 %v1672, 1.442695
        %v1750 = vpow.pop %v1749
        %v1751 = vmul.f32 %v1673, 1.442695
        %v1752 = vpow.pop %v1751
        %v1753 = vmul.f32 %v1674, 1.442695
        %v1754 = vpow.pop %v1753
        %v1755 = vmul.f32 %v1675, 1.442695
        %v1756 = vpow.pop %v1755
        %v1757 = vmul.f32 %v1676, 1.442695
        %v1758 = vpow.pop %v1757
        %v1759 = vmul.f32 %v1677, 1.442695
        %v1760 = vpow.pop %v1759
        %v1761 = vmul.f32 %v1678, 1.442695
        %v1762 = vpow.pop %v1761
        %v1763 = vmul.f32 %v1679, 1.442695
        %v1764 = vpow.pop %v1763
        %v1765 = vmul.f32 %v1680, 1.442695
        %v1766 = vpow.pop %v1765
        %v1767 = vmul.f32 %v1681, 1.442695
        %v1768 = vpow.pop %v1767
        %v1769 = vmul.f32 %v1682, 1.442695
        %v1770 = vpow.pop %v1769
        %v1771 = vmul.f32 %v1683, 1.442695
        %v1772 = vpow.pop %v1771
        %v1773 = vmul.f32 %v1684, 1.442695
        %v1774 = vpow.pop %v1773
        %v1775 = vmul.f32 %v1685, 1.442695
        %v1776 = vpow.pop %v1775
        %v1777 = vmul.f32 %v1686, 1.442695
        %v1778 = vpow.pop %v1777
        %v1779 = vmul.f32 %v1687, 1.442695
        %v1780 = vpow.pop %v1779
        %v1781 = vmul.f32 %v1688, 1.442695
        %v1782 = vpow.pop %v1781
        %v1783 = vmul.f32 %v1689, 1.442695
        %v1784 = vpow.pop %v1783
        %v1785 = vmul.f32 %v1690, 1.442695
        %v1786 = vpow.pop %v1785
        %v1787 = vmul.f32 %v1691, 1.442695
        %v1788 = vpow.pop %v1787
        %v1789 = vmul.f32 %v1692, 1.442695
        %v1790 = vpow.pop %v1789
        %v1791 = vmul.f32 %v1693, 1.442695
        %v1792 = vpow.pop %v1791
        %v1793 = vmul.f32 %v1694, 1.442695
        %v1794 = vpow.pop %v1793
        %v1795 = vmul.f32 %v1695, 1.442695
        %v1796 = vpow.pop %v1795
        %v1797 = vmul.f32 %v1696, 1.442695
        %v1798 = vpow.pop %v1797
        %v1799 = vmul.f32 %v1697, 1.442695
        %v1800 = vpow.pop %v1799
        %v1801 = vmul.f32 %v1698, 1.442695
        %v1802 = vpow.pop %v1801
        %v1803 = vmul.f32 %v1699, 1.442695
        %v1804 = vpow.pop %v1803
        %v1805 = vmul.f32 %v1700, 1.442695
        %v1806 = vpow.pop %v1805
        %v1807 = vmul.f32 %v1701, 1.442695
        %v1808 = vpow.pop %v1807
        %v1809 = vmul.f32 %v1702, 1.442695
        %v1810 = vpow.pop %v1809
        %v1811 = vmul.f32 %v1703, 1.442695
        %v1812 = vpow.pop %v1811
        %v1813 = vmul.f32 %v1704, 1.442695
        %v1814 = vpow.pop %v1813
        %v1815 = vmul.f32 %v1705, 1.442695
        %v1816 = vpow.pop %v1815
        %v1817 = vmul.f32 %v1706, 1.442695
        %v1818 = vpow.pop %v1817
        %v1819 = vmul.f32 %v1707, 1.442695
        %v1820 = vpow.pop %v1819
        %v1821 = vmul.f32 %v1708, 1.442695
        %v1822 = vpow.pop %v1821
        %v1823 = vmul.f32 %v1709, 1.442695
        %v1824 = vpow.pop %v1823
        %v1825 = vmul.f32 %v1710, 1.442695
        %v1826 = vpow.pop %v1825
        %v1827 = vmul.f32 %v1711, 1.442695
        %v1828 = vpow.pop %v1827
        %v1829 = vmul.f32 %v1712, 1.442695
        %v1830 = vpow.pop %v1829
        %v1831 = vmul.f32 %v1713, 1.442695
        %v1832 = vpow.pop %v1831
        %v1833 = vmul.f32 %v1714, 1.442695
        %v1834 = vpow.pop %v1833
        %v1835 = vmul.f32 %v1715, 1.442695
        %v1836 = vpow.pop %v1835
        %v1837 = vmul.f32 %v1716, 1.442695
        %v1838 = vpow.pop %v1837
        %v1839 = vmul.f32 %v1717, 1.442695
        %v1840 = vpow.pop %v1839
        %v1841 = vmul.f32 %v1718, 1.442695
        %v1842 = vpow.pop %v1841
        %v1843 = vmul.f32 %v1719, 1.442695
        %v1844 = vpow.pop %v1843
        %v1845 = vmul.f32 %v1720, 1.442695
        %v1846 = vpow.pop %v1845
        %v1847 = vmul.f32 %v1721, 1.442695
        %v1848 = vpow.pop %v1847
        %v1849 = vmul.f32 %v1722, 1.442695
        %v1850 = vpow.pop %v1849
        %1851 = vadd.xlane.f32.xlu0 %v1724
        %v1852 = vpop.xlane.xlu0 %1851
        %1853 = vadd.xlane.f32.xlu0 %v1726
        %v1854 = vpop.xlane.xlu0 %1853
        %1855 = vadd.xlane.f32.xlu0 %v1728
        %v1856 = vpop.xlane.xlu0 %1855
        %1857 = vadd.xlane.f32.xlu0 %v1730
        %v1858 = vpop.xlane.xlu0 %1857
        %1859 = vadd.xlane.f32.xlu0 %v1732
        %v1860 = vpop.xlane.xlu0 %1859
        %1861 = vadd.xlane.f32.xlu0 %v1734
        %v1862 = vpop.xlane.xlu0 %1861
        %1863 = vadd.xlane.f32.xlu0 %v1736
        %v1864 = vpop.xlane.xlu0 %1863
        %1865 = vadd.xlane.f32.xlu0 %v1738
        %v1866 = vpop.xlane.xlu0 %1865
        %1867 = vadd.xlane.f32.xlu0 %v1740
        %v1868 = vpop.xlane.xlu0 %1867
        %1869 = vadd.xlane.f32.xlu0 %v1742
        %v1870 = vpop.xlane.xlu0 %1869
        %1871 = vadd.xlane.f32.xlu0 %v1744
        %v1872 = vpop.xlane.xlu0 %1871
        %1873 = vadd.xlane.f32.xlu0 %v1746
        %v1874 = vpop.xlane.xlu0 %1873
        %1875 = vadd.xlane.f32.xlu0 %v1748
        %v1876 = vpop.xlane.xlu0 %1875
        %1877 = vadd.xlane.f32.xlu0 %v1750
        %v1878 = vpop.xlane.xlu0 %1877
        %1879 = vadd.xlane.f32.xlu0 %v1752
        %v1880 = vpop.xlane.xlu0 %1879
        %1881 = vadd.xlane.f32.xlu0 %v1754
        %v1882 = vpop.xlane.xlu0 %1881
        %1883 = vadd.xlane.f32.xlu0 %v1756
        %v1884 = vpop.xlane.xlu0 %1883
        %1885 = vadd.xlane.f32.xlu0 %v1758
        %v1886 = vpop.xlane.xlu0 %1885
        %1887 = vadd.xlane.f32.xlu0 %v1760
        %v1888 = vpop.xlane.xlu0 %1887
        %1889 = vadd.xlane.f32.xlu0 %v1762
        %v1890 = vpop.xlane.xlu0 %1889
        %1891 = vadd.xlane.f32.xlu0 %v1764
        %v1892 = vpop.xlane.xlu0 %1891
        %1893 = vadd.xlane.f32.xlu0 %v1766
        %v1894 = vpop.xlane.xlu0 %1893
        %1895 = vadd.xlane.f32.xlu0 %v1768
        %v1896 = vpop.xlane.xlu0 %1895
        %1897 = vadd.xlane.f32.xlu0 %v1770
        %v1898 = vpop.xlane.xlu0 %1897
        %1899 = vadd.xlane.f32.xlu0 %v1772
        %v1900 = vpop.xlane.xlu0 %1899
        %1901 = vadd.xlane.f32.xlu0 %v1774
        %v1902 = vpop.xlane.xlu0 %1901
        %1903 = vadd.xlane.f32.xlu0 %v1776
        %v1904 = vpop.xlane.xlu0 %1903
        %1905 = vadd.xlane.f32.xlu0 %v1778
        %v1906 = vpop.xlane.xlu0 %1905
        %1907 = vadd.xlane.f32.xlu0 %v1780
        %v1908 = vpop.xlane.xlu0 %1907
        %1909 = vadd.xlane.f32.xlu0 %v1782
        %v1910 = vpop.xlane.xlu0 %1909
        %1911 = vadd.xlane.f32.xlu0 %v1784
        %v1912 = vpop.xlane.xlu0 %1911
        %1913 = vadd.xlane.f32.xlu0 %v1786
        %v1914 = vpop.xlane.xlu0 %1913
        %1915 = vadd.xlane.f32.xlu0 %v1788
        %v1916 = vpop.xlane.xlu0 %1915
        %1917 = vadd.xlane.f32.xlu0 %v1790
        %v1918 = vpop.xlane.xlu0 %1917
        %1919 = vadd.xlane.f32.xlu0 %v1792
        %v1920 = vpop.xlane.xlu0 %1919
        %1921 = vadd.xlane.f32.xlu0 %v1794
        %v1922 = vpop.xlane.xlu0 %1921
        %1923 = vadd.xlane.f32.xlu0 %v1796
        %v1924 = vpop.xlane.xlu0 %1923
        %1925 = vadd.xlane.f32.xlu0 %v1798
        %v1926 = vpop.xlane.xlu0 %1925
        %1927 = vadd.xlane.f32.xlu0 %v1800
        %v1928 = vpop.xlane.xlu0 %1927
        %1929 = vadd.xlane.f32.xlu0 %v1802
        %v1930 = vpop.xlane.xlu0 %1929
        %1931 = vadd.xlane.f32.xlu0 %v1804
        %v1932 = vpop.xlane.xlu0 %1931
        %1933 = vadd.xlane.f32.xlu0 %v1806
        %v1934 = vpop.xlane.xlu0 %1933
        %1935 = vadd.xlane.f32.xlu0 %v1808
        %v1936 = vpop.xlane.xlu0 %1935
        %1937 = vadd.xlane.f32.xlu0 %v1810
        %v1938 = vpop.xlane.xlu0 %1937
        %1939 = vadd.xlane.f32.xlu0 %v1812
        %v1940 = vpop.xlane.xlu0 %1939
        %1941 = vadd.xlane.f32.xlu0 %v1814
        %v1942 = vpop.xlane.xlu0 %1941
        %1943 = vadd.xlane.f32.xlu0 %v1816
        %v1944 = vpop.xlane.xlu0 %1943
        %1945 = vadd.xlane.f32.xlu0 %v1818
        %v1946 = vpop.xlane.xlu0 %1945
        %1947 = vadd.xlane.f32.xlu0 %v1820
        %v1948 = vpop.xlane.xlu0 %1947
        %1949 = vadd.xlane.f32.xlu0 %v1822
        %v1950 = vpop.xlane.xlu0 %1949
        %1951 = vadd.xlane.f32.xlu0 %v1824
        %v1952 = vpop.xlane.xlu0 %1951
        %1953 = vadd.xlane.f32.xlu0 %v1826
        %v1954 = vpop.xlane.xlu0 %1953
        %1955 = vadd.xlane.f32.xlu0 %v1828
        %v1956 = vpop.xlane.xlu0 %1955
        %1957 = vadd.xlane.f32.xlu0 %v1830
        %v1958 = vpop.xlane.xlu0 %1957
        %1959 = vadd.xlane.f32.xlu0 %v1832
        %v1960 = vpop.xlane.xlu0 %1959
        %1961 = vadd.xlane.f32.xlu0 %v1834
        %v1962 = vpop.xlane.xlu0 %1961
        %1963 = vadd.xlane.f32.xlu0 %v1836
        %v1964 = vpop.xlane.xlu0 %1963
        %1965 = vadd.xlane.f32.xlu0 %v1838
        %v1966 = vpop.xlane.xlu0 %1965
        %1967 = vadd.xlane.f32.xlu0 %v1840
        %v1968 = vpop.xlane.xlu0 %1967
        %1969 = vadd.xlane.f32.xlu0 %v1842
        %v1970 = vpop.xlane.xlu0 %1969
        %1971 = vadd.xlane.f32.xlu0 %v1844
        %v1972 = vpop.xlane.xlu0 %1971
        %1973 = vadd.xlane.f32.xlu0 %v1846
        %v1974 = vpop.xlane.xlu0 %1973
        %1975 = vadd.xlane.f32.xlu0 %v1848
        %v1976 = vpop.xlane.xlu0 %1975
        %1977 = vadd.xlane.f32.xlu0 %v1850
        %v1978 = vpop.xlane.xlu0 %1977
        %v1979 = vrcp.pop %v1852
        %v1980 = vrcp.pop %v1854
        %v1981 = vrcp.pop %v1856
        %v1982 = vrcp.pop %v1858
        %v1983 = vrcp.pop %v1860
        %v1984 = vrcp.pop %v1862
        %v1985 = vrcp.pop %v1864
        %v1986 = vrcp.pop %v1866
        %v1987 = vrcp.pop %v1868
        %v1988 = vrcp.pop %v1870
        %v1989 = vrcp.pop %v1872
        %v1990 = vrcp.pop %v1874
        %v1991 = vrcp.pop %v1876
        %v1992 = vrcp.pop %v1878
        %v1993 = vrcp.pop %v1880
        %v1994 = vrcp.pop %v1882
        %v1995 = vrcp.pop %v1884
        %v1996 = vrcp.pop %v1886
        %v1997 = vrcp.pop %v1888
        %v1998 = vrcp.pop %v1890
        %v1999 = vrcp.pop %v1892
        %v2000 = vrcp.pop %v1894
        %v2001 = vrcp.pop %v1896
        %v2002 = vrcp.pop %v1898
        %v2003 = vrcp.pop %v1900
        %v2004 = vrcp.pop %v1902
        %v2005 = vrcp.pop %v1904
        %v2006 = vrcp.pop %v1906
        %v2007 = vrcp.pop %v1908
        %v2008 = vrcp.pop %v1910
        %v2009 = vrcp.pop %v1912
        %v2010 = vrcp.pop %v1914
        %v2011 = vrcp.pop %v1916
        %v2012 = vrcp.pop %v1918
        %v2013 = vrcp.pop %v1920
        %v2014 = vrcp.pop %v1922
        %v2015 = vrcp.pop %v1924
        %v2016 = vrcp.pop %v1926
        %v2017 = vrcp.pop %v1928
        %v2018 = vrcp.pop %v1930
        %v2019 = vrcp.pop %v1932
        %v2020 = vrcp.pop %v1934
        %v2021 = vrcp.pop %v1936
        %v2022 = vrcp.pop %v1938
        %v2023 = vrcp.pop %v1940
        %v2024 = vrcp.pop %v1942
        %v2025 = vrcp.pop %v1944
        %v2026 = vrcp.pop %v1946
        %v2027 = vrcp.pop %v1948
        %v2028 = vrcp.pop %v1950
        %v2029 = vrcp.pop %v1952
        %v2030 = vrcp.pop %v1954
        %v2031 = vrcp.pop %v1956
        %v2032 = vrcp.pop %v1958
        %v2033 = vrcp.pop %v1960
        %v2034 = vrcp.pop %v1962
        %v2035 = vrcp.pop %v1964
        %v2036 = vrcp.pop %v1966
        %v2037 = vrcp.pop %v1968
        %v2038 = vrcp.pop %v1970
        %v2039 = vrcp.pop %v1972
        %v2040 = vrcp.pop %v1974
        %v2041 = vrcp.pop %v1976
        %v2042 = vrcp.pop %v1978
        %v2043 = vmul.f32 %v1724, %v1979
        %v2044 = vmul.f32 %v1726, %v1980
        %v2045 = vmul.f32 %v1728, %v1981
        %v2046 = vmul.f32 %v1730, %v1982
        %v2047 = vmul.f32 %v1732, %v1983
        %v2048 = vmul.f32 %v1734, %v1984
        %v2049 = vmul.f32 %v1736, %v1985
        %v2050 = vmul.f32 %v1738, %v1986
        %v2051 = vmul.f32 %v1740, %v1987
        %v2052 = vmul.f32 %v1742, %v1988
        %v2053 = vmul.f32 %v1744, %v1989
        %v2054 = vmul.f32 %v1746, %v1990
        %v2055 = vmul.f32 %v1748, %v1991
        %v2056 = vmul.f32 %v1750, %v1992
        %v2057 = vmul.f32 %v1752, %v1993
        %v2058 = vmul.f32 %v1754, %v1994
        %v2059 = vmul.f32 %v1756, %v1995
        %v2060 = vmul.f32 %v1758, %v1996
        %v2061 = vmul.f32 %v1760, %v1997
        %v2062 = vmul.f32 %v1762, %v1998
        %v2063 = vmul.f32 %v1764, %v1999
        %v2064 = vmul.f32 %v1766, %v2000
        %v2065 = vmul.f32 %v1768, %v2001
        %v2066 = vmul.f32 %v1770, %v2002
        %v2067 = vmul.f32 %v1772, %v2003
        %v2068 = vmul.f32 %v1774, %v2004
        %v2069 = vmul.f32 %v1776, %v2005
        %v2070 = vmul.f32 %v1778, %v2006
        %v2071 = vmul.f32 %v1780, %v2007
        %v2072 = vmul.f32 %v1782, %v2008
        %v2073 = vmul.f32 %v1784, %v2009
        %v2074 = vmul.f32 %v1786, %v2010
        %v2075 = vmul.f32 %v1788, %v2011
        %v2076 = vmul.f32 %v1790, %v2012
        %v2077 = vmul.f32 %v1792, %v2013
        %v2078 = vmul.f32 %v1794, %v2014
        %v2079 = vmul.f32 %v1796, %v2015
        %v2080 = vmul.f32 %v1798, %v2016
        %v2081 = vmul.f32 %v1800, %v2017
        %v2082 = vmul.f32 %v1802, %v2018
        %v2083 = vmul.f32 %v1804, %v2019
        %v2084 = vmul.f32 %v1806, %v2020
        %v2085 = vmul.f32 %v1808, %v2021
        %v2086 = vmul.f32 %v1810, %v2022
        %v2087 = vmul.f32 %v1812, %v2023
        %v2088 = vmul.f32 %v1814, %v2024
        %v2089 = vmul.f32 %v1816, %v2025
        %v2090 = vmul.f32 %v1818, %v2026
        %v2091 = vmul.f32 %v1820, %v2027
        %v2092 = vmul.f32 %v1822, %v2028
        %v2093 = vmul.f32 %v1824, %v2029
        %v2094 = vmul.f32 %v1826, %v2030
        %v2095 = vmul.f32 %v1828, %v2031
        %v2096 = vmul.f32 %v1830, %v2032
        %v2097 = vmul.f32 %v1832, %v2033
        %v2098 = vmul.f32 %v1834, %v2034
        %v2099 = vmul.f32 %v1836, %v2035
        %v2100 = vmul.f32 %v1838, %v2036
        %v2101 = vmul.f32 %v1840, %v2037
        %v2102 = vmul.f32 %v1842, %v2038
        %v2103 = vmul.f32 %v1844, %v2039
        %v2104 = vmul.f32 %v1846, %v2040
        %v2105 = vmul.f32 %v1848, %v2041
        %v2106 = vmul.f32 %v1850, %v2042
        %2107 = vmatprep.subr.mxu0 0.0
        %2108 = vmatpush1.msra.mxu0 %v374
        %2109 = vmatprep.subr.mxu0 0.0
        %2110 = vmatpush1.msra.mxu0 %v375
        %2111 = vmatprep.subr.mxu0 0.0
        %2112 = vmatpush1.msra.mxu0 %v376
        %2113 = vmatprep.subr.mxu0 0.0
        %2114 = vmatpush1.msra.mxu0 %v377
        %2115 = vmatprep.subr.mxu0 0.0
        %2116 = vmatpush1.msra.mxu0 %v378
        %2117 = vmatprep.subr.mxu0 0.0
        %2118 = vmatpush1.msra.mxu0 %v379
        %2119 = vmatprep.subr.mxu0 0.0
        %2120 = vmatpush1.msra.mxu0 %v380
        %2121 = vmatprep.subr.mxu0 0.0
        %2122 = vmatpush1.msra.mxu0 %v381
        %2123 = vmatprep.subr.mxu0 0.0
        %2124 = vmatpush1.msra.mxu0 %v382
        %2125 = vmatprep.subr.mxu0 0.0
        %2126 = vmatpush1.msra.mxu0 %v383
        %2127 = vmatprep.subr.mxu0 0.0
        %2128 = vmatpush1.msra.mxu0 %v384
        %2129 = vmatprep.subr.mxu0 0.0
        %2130 = vmatpush1.msra.mxu0 %v385
        %2131 = vmatprep.subr.mxu0 0.0
        %2132 = vmatpush1.msra.mxu0 %v386
        %2133 = vmatprep.subr.mxu0 0.0
        %2134 = vmatpush1.msra.mxu0 %v387
        %2135 = vmatprep.subr.mxu0 0.0
        %2136 = vmatpush1.msra.mxu0 %v388
        %2137 = vmatprep.subr.mxu0 0.0
        %2138 = vmatpush1.msra.mxu0 %v389
        %2139 = vmatprep.subr.mxu0 0.0
        %2140 = vmatpush1.msra.mxu0 0.0
        %2141 = vmatprep.subr.mxu0 0.0
        %2142 = vmatpush1.msra.mxu0 0.0
        %2143 = vmatprep.subr.mxu0 0.0
        %2144 = vmatpush1.msra.mxu0 0.0
        %2145 = vmatprep.subr.mxu0 0.0
        %2146 = vmatpush1.msra.mxu0 0.0
        %2147 = vmatprep.subr.mxu0 0.0
        %2148 = vmatpush1.msra.mxu0 0.0
        %2149 = vmatprep.subr.mxu0 0.0
        %2150 = vmatpush1.msra.mxu0 0.0
        %2151 = vmatprep.subr.mxu0 0.0
        %2152 = vmatpush1.msra.mxu0 0.0
        %2153 = vmatprep.subr.mxu0 0.0
        %2154 = vmatpush1.msra.mxu0 0.0
        %2155 = vmatprep.subr.mxu0 0.0
        %2156 = vmatpush1.msra.mxu0 0.0
        %2157 = vmatprep.subr.mxu0 0.0
        %2158 = vmatpush1.msra.mxu0 0.0
        %2159 = vmatprep.subr.mxu0 0.0
        %2160 = vmatpush1.msra.mxu0 0.0
        %2161 = vmatprep.subr.mxu0 0.0
        %2162 = vmatpush1.msra.mxu0 0.0
        %2163 = vmatprep.subr.mxu0 0.0
        %2164 = vmatpush1.msra.mxu0 0.0
        %2165 = vmatprep.subr.mxu0 0.0
        %2166 = vmatpush1.msra.mxu0 0.0
        %2167 = vmatprep.subr.mxu0 0.0
        %2168 = vmatpush1.msra.mxu0 0.0
        %2169 = vmatprep.subr.mxu0 0.0
        %2170 = vmatpush1.msra.mxu0 0.0
        %2171 = vmatprep.mubr.f32.mxu0 0.0
        %2172 = vmatmul.mubr.f32.gmra.mrb[0].mxu0 %v2043
        %v2173 = vpop.f32.mrb[0].mxu0
        %v2174 = vadd.f32 0.0, %v2173
        %v2175 = vpop.f32.mrb[0].mxu0
        %2176 = vmatprep.mubr.f32.mxu0 0.0
        %2177 = vmatmul.mubr.f32.gmra.mrb[0].mxu0 %v2044
        %v2178 = vpop.f32.mrb[0].mxu0
        %v2179 = vadd.f32 0.0, %v2178
        %v2180 = vpop.f32.mrb[0].mxu0
        %2181 = vmatprep.mubr.f32.mxu0 0.0
        %2182 = vmatmul.mubr.f32.gmra.mrb[0].mxu0 %v2045
        %v2183 = vpop.f32.mrb[0].mxu0
        %v2184 = vadd.f32 0.0, %v2183
        %v2185 = vpop.f32.mrb[0].mxu0
        %2186 = vmatprep.mubr.f32.mxu0 0.0
        %2187 = vmatmul.mubr.f32.gmra.mrb[0].mxu0 %v2046
        %v2188 = vpop.f32.mrb[0].mxu0
        %v2189 = vadd.f32 0.0, %v2188
        %v2190 = vpop.f32.mrb[0].mxu0
        %2191 = vmatprep.mubr.f32.mxu0 0.0
        %2192 = vmatmul.mubr.f32.gmra.mrb[0].mxu0 %v2047
        %v2193 = vpop.f32.mrb[0].mxu0
        %v2194 = vadd.f32 0.0, %v2193
        %v2195 = vpop.f32.mrb[0].mxu0
        %2196 = vmatprep.mubr.f32.mxu0 0.0
        %2197 = vmatmul.mubr.f32.gmra.mrb[0].mxu0 %v2048
        %v2198 = vpop.f32.mrb[0].mxu0
        %v2199 = vadd.f32 0.0, %v2198
        %v2200 = vpop.f32.mrb[0].mxu0
        %2201 = vmatprep.mubr.f32.mxu0 0.0
        %2202 = vmatmul.mubr.f32.gmra.mrb[0].mxu0 %v2049
        %v2203 = vpop.f32.mrb[0].mxu0
        %v2204 = vadd.f32 0.0, %v2203
        %v2205 = vpop.f32.mrb[0].mxu0
        %2206 = vmatprep.mubr.f32.mxu0 0.0
        %2207 = vmatmul.mubr.f32.gmra.mrb[0].mxu0 %v2050
        %v2208 = vpop.f32.mrb[0].mxu0
        %v2209 = vadd.f32 0.0, %v2208
        %v2210 = vpop.f32.mrb[0].mxu0
        %2211 = vmatprep.mubr.f32.mxu0 0.0
        %2212 = vmatmul.mubr.f32.gmra.mrb[0].mxu0 %v2051
        %v2213 = vpop.f32.mrb[0].mxu0
        %v2214 = vadd.f32 0.0, %v2213
        %v2215 = vpop.f32.mrb[0].mxu0
        %2216 = vmatprep.mubr.f32.mxu0 0.0
        %2217 = vmatmul.mubr.f32.gmra.mrb[0].mxu0 %v2052
        %v2218 = vpop.f32.mrb[0].mxu0
        %v2219 = vadd.f32 0.0, %v2218
        %v2220 = vpop.f32.mrb[0].mxu0
        %2221 = vmatprep.mubr.f32.mxu0 0.0
        %2222 = vmatmul.mubr.f32.gmra.mrb[0].mxu0 %v2053
        %v2223 = vpop.f32.mrb[0].mxu0
        %v2224 = vadd.f32 0.0, %v2223
        %v2225 = vpop.f32.mrb[0].mxu0
        %2226 = vmatprep.mubr.f32.mxu0 0.0
        %2227 = vmatmul.mubr.f32.gmra.mrb[0].mxu0 %v2054
        %v2228 = vpop.f32.mrb[0].mxu0
        %v2229 = vadd.f32 0.0, %v2228
        %v2230 = vpop.f32.mrb[0].mxu0
        %2231 = vmatprep.mubr.f32.mxu0 0.0
        %2232 = vmatmul.mubr.f32.gmra.mrb[0].mxu0 %v2055
        %v2233 = vpop.f32.mrb[0].mxu0
        %v2234 = vadd.f32 0.0, %v2233
        %v2235 = vpop.f32.mrb[0].mxu0
        %2236 = vmatprep.mubr.f32.mxu0 0.0
        %2237 = vmatmul.mubr.f32.gmra.mrb[0].mxu0 %v2056
        %v2238 = vpop.f32.mrb[0].mxu0
        %v2239 = vadd.f32 0.0, %v2238
        %v2240 = vpop.f32.mrb[0].mxu0
        %2241 = vmatprep.mubr.f32.mxu0 0.0
        %2242 = vmatmul.mubr.f32.gmra.mrb[0].mxu0 %v2057
        %v2243 = vpop.f32.mrb[0].mxu0
        %v2244 = vadd.f32 0.0, %v2243
        %v2245 = vpop.f32.mrb[0].mxu0
        %2246 = vmatprep.mubr.f32.mxu0 0.0
        %2247 = vmatmul.mubr.f32.gmra.mrb[0].mxu0 %v2058
        %v2248 = vpop.f32.mrb[0].mxu0
        %v2249 = vadd.f32 0.0, %v2248
        %v2250 = vpop.f32.mrb[0].mxu0
        %2251 = vdwg.mxu0
        %2252 = vmatprep.subr.mxu0 0.0
        %2253 = vmatpush1.msra.mxu0 %v390
        %2254 = vmatprep.subr.mxu0 0.0
        %2255 = vmatpush1.msra.mxu0 %v391
        %2256 = vmatprep.subr.mxu0 0.0
        %2257 = vmatpush1.msra.mxu0 %v392
        %2258 = vmatprep.subr.mxu0 0.0
        %2259 = vmatpush1.msra.mxu0 %v393
        %2260 = vmatprep.subr.mxu0 0.0
        %2261 = vmatpush1.msra.mxu0 %v394
        %2262 = vmatprep.subr.mxu0 0.0
        %2263 = vmatpush1.msra.mxu0 %v395
        %2264 = vmatprep.subr.mxu0 0.0
        %2265 = vmatpush1.msra.mxu0 %v396
        %2266 = vmatprep.subr.mxu0 0.0
        %2267 = vmatpush1.msra.mxu0 %v397
        %2268 = vmatprep.subr.mxu0 0.0
        %2269 = vmatpush1.msra.mxu0 %v398
        %2270 = vmatprep.subr.mxu0 0.0
        %2271 = vmatpush1.msra.mxu0 %v399
        %2272 = vmatprep.subr.mxu0 0.0
        %2273 = vmatpush1.msra.mxu0 %v400
        %2274 = vmatprep.subr.mxu0 0.0
        %2275 = vmatpush1.msra.mxu0 %v401
        %2276 = vmatprep.subr.mxu0 0.0
        %2277 = vmatpush1.msra.mxu0 %v402
        %2278 = vmatprep.subr.mxu0 0.0
        %2279 = vmatpush1.msra.mxu0 %v403
        %2280 = vmatprep.subr.mxu0 0.0
        %2281 = vmatpush1.msra.mxu0 %v404
        %2282 = vmatprep.subr.mxu0 0.0
        %2283 = vmatpush1.msra.mxu0 %v405
        %2284 = vmatprep.subr.mxu0 0.0
        %2285 = vmatpush1.msra.mxu0 0.0
        %2286 = vmatprep.subr.mxu0 0.0
        %2287 = vmatpush1.msra.mxu0 0.0
        %2288 = vmatprep.subr.mxu0 0.0
        %2289 = vmatpush1.msra.mxu0 0.0
        %2290 = vmatprep.subr.mxu0 0.0
        %2291 = vmatpush1.msra.mxu0 0.0
        %2292 = vmatprep.subr.mxu0 0.0
        %2293 = vmatpush1.msra.mxu0 0.0
        %2294 = vmatprep.subr.mxu0 0.0
        %2295 = vmatpush1.msra.mxu0 0.0
        %2296 = vmatprep.subr.mxu0 0.0
        %2297 = vmatpush1.msra.mxu0 0.0
        %2298 = vmatprep.subr.mxu0 0.0
        %2299 = vmatpush1.msra.mxu0 0.0
        %2300 = vmatprep.subr.mxu0 0.0
        %2301 = vmatpush1.msra.mxu0 0.0
        %2302 = vmatprep.subr.mxu0 0.0
        %2303 = vmatpush1.msra.mxu0 0.0
        %2304 = vmatprep.subr.mxu0 0.0
        %2305 = vmatpush1.msra.mxu0 0.0
        %2306 = vmatprep.subr.mxu0 0.0
        %2307 = vmatpush1.msra.mxu0 0.0
        %2308 = vmatprep.subr.mxu0 0.0
        %2309 = vmatpush1.msra.mxu0 0.0
        %2310 = vmatprep.subr.mxu0 0.0
        %2311 = vmatpush1.msra.mxu0 0.0
        %2312 = vmatprep.subr.mxu0 0.0
        %2313 = vmatpush1.msra.mxu0 0.0
        %2314 = vmatprep.subr.mxu0 0.0
        %2315 = vmatpush1.msra.mxu0 0.0
        %2316 = vmatprep.mubr.f32.mxu0 0.0
        %2317 = vmatmul.mubr.f32.gmra.mrb[0].mxu0 %v2059
        %v2318 = vpop.f32.mrb[0].mxu0
        %v2319 = vadd.f32 0.0, %v2318
        %v2320 = vpop.f32.mrb[0].mxu0
        %2321 = vmatprep.mubr.f32.mxu0 0.0
        %2322 = vmatmul.mubr.f32.gmra.mrb[0].mxu0 %v2060
        %v2323 = vpop.f32.mrb[0].mxu0
        %v2324 = vadd.f32 0.0, %v2323
        %v2325 = vpop.f32.mrb[0].mxu0
        %2326 = vmatprep.mubr.f32.mxu0 0.0
        %2327 = vmatmul.mubr.f32.gmra.mrb[0].mxu0 %v2061
        %v2328 = vpop.f32.mrb[0].mxu0
        %v2329 = vadd.f32 0.0, %v2328
        %v2330 = vpop.f32.mrb[0].mxu0
        %2331 = vmatprep.mubr.f32.mxu0 0.0
        %2332 = vmatmul.mubr.f32.gmra.mrb[0].mxu0 %v2062
        %v2333 = vpop.f32.mrb[0].mxu0
        %v2334 = vadd.f32 0.0, %v2333
        %v2335 = vpop.f32.mrb[0].mxu0
        %2336 = vmatprep.mubr.f32.mxu0 0.0
        %2337 = vmatmul.mubr.f32.gmra.mrb[0].mxu0 %v2063
        %v2338 = vpop.f32.mrb[0].mxu0
        %v2339 = vadd.f32 0.0, %v2338
        %v2340 = vpop.f32.mrb[0].mxu0
        %2341 = vmatprep.mubr.f32.mxu0 0.0
        %2342 = vmatmul.mubr.f32.gmra.mrb[0].mxu0 %v2064
        %v2343 = vpop.f32.mrb[0].mxu0
        %v2344 = vadd.f32 0.0, %v2343
        %v2345 = vpop.f32.mrb[0].mxu0
        %2346 = vmatprep.mubr.f32.mxu0 0.0
        %2347 = vmatmul.mubr.f32.gmra.mrb[0].mxu0 %v2065
        %v2348 = vpop.f32.mrb[0].mxu0
        %v2349 = vadd.f32 0.0, %v2348
        %v2350 = vpop.f32.mrb[0].mxu0
        %2351 = vmatprep.mubr.f32.mxu0 0.0
        %2352 = vmatmul.mubr.f32.gmra.mrb[0].mxu0 %v2066
        %v2353 = vpop.f32.mrb[0].mxu0
        %v2354 = vadd.f32 0.0, %v2353
        %v2355 = vpop.f32.mrb[0].mxu0
        %2356 = vmatprep.mubr.f32.mxu0 0.0
        %2357 = vmatmul.mubr.f32.gmra.mrb[0].mxu0 %v2067
        %v2358 = vpop.f32.mrb[0].mxu0
        %v2359 = vadd.f32 0.0, %v2358
        %v2360 = vpop.f32.mrb[0].mxu0
        %2361 = vmatprep.mubr.f32.mxu0 0.0
        %2362 = vmatmul.mubr.f32.gmra.mrb[0].mxu0 %v2068
        %v2363 = vpop.f32.mrb[0].mxu0
        %v2364 = vadd.f32 0.0, %v2363
        %v2365 = vpop.f32.mrb[0].mxu0
        %2366 = vmatprep.mubr.f32.mxu0 0.0
        %2367 = vmatmul.mubr.f32.gmra.mrb[0].mxu0 %v2069
        %v2368 = vpop.f32.mrb[0].mxu0
        %v2369 = vadd.f32 0.0, %v2368
        %v2370 = vpop.f32.mrb[0].mxu0
        %2371 = vmatprep.mubr.f32.mxu0 0.0
        %2372 = vmatmul.mubr.f32.gmra.mrb[0].mxu0 %v2070
        %v2373 = vpop.f32.mrb[0].mxu0
        %v2374 = vadd.f32 0.0, %v2373
        %v2375 = vpop.f32.mrb[0].mxu0
        %2376 = vmatprep.mubr.f32.mxu0 0.0
        %2377 = vmatmul.mubr.f32.gmra.mrb[0].mxu0 %v2071
        %v2378 = vpop.f32.mrb[0].mxu0
        %v2379 = vadd.f32 0.0, %v2378
        %v2380 = vpop.f32.mrb[0].mxu0
        %2381 = vmatprep.mubr.f32.mxu0 0.0
        %2382 = vmatmul.mubr.f32.gmra.mrb[0].mxu0 %v2072
        %v2383 = vpop.f32.mrb[0].mxu0
        %v2384 = vadd.f32 0.0, %v2383
        %v2385 = vpop.f32.mrb[0].mxu0
        %2386 = vmatprep.mubr.f32.mxu0 0.0
        %2387 = vmatmul.mubr.f32.gmra.mrb[0].mxu0 %v2073
        %v2388 = vpop.f32.mrb[0].mxu0
        %v2389 = vadd.f32 0.0, %v2388
        %v2390 = vpop.f32.mrb[0].mxu0
        %2391 = vmatprep.mubr.f32.mxu0 0.0
        %2392 = vmatmul.mubr.f32.gmra.mrb[0].mxu0 %v2074
        %v2393 = vpop.f32.mrb[0].mxu0
        %v2394 = vadd.f32 0.0, %v2393
        %v2395 = vpop.f32.mrb[0].mxu0
        %2396 = vdwg.mxu0
        %2397 = vmatprep.subr.mxu0 0.0
        %2398 = vmatpush1.msra.mxu0 %v406
        %2399 = vmatprep.subr.mxu0 0.0
        %2400 = vmatpush1.msra.mxu0 %v407
        %2401 = vmatprep.subr.mxu0 0.0
        %2402 = vmatpush1.msra.mxu0 %v408
        %2403 = vmatprep.subr.mxu0 0.0
        %2404 = vmatpush1.msra.mxu0 %v409
        %2405 = vmatprep.subr.mxu0 0.0
        %2406 = vmatpush1.msra.mxu0 %v410
        %2407 = vmatprep.subr.mxu0 0.0
        %2408 = vmatpush1.msra.mxu0 %v411
        %2409 = vmatprep.subr.mxu0 0.0
        %2410 = vmatpush1.msra.mxu0 %v412
        %2411 = vmatprep.subr.mxu0 0.0
        %2412 = vmatpush1.msra.mxu0 %v413
        %2413 = vmatprep.subr.mxu0 0.0
        %2414 = vmatpush1.msra.mxu0 %v414
        %2415 = vmatprep.subr.mxu0 0.0
        %2416 = vmatpush1.msra.mxu0 %v415
        %2417 = vmatprep.subr.mxu0 0.0
        %2418 = vmatpush1.msra.mxu0 %v416
        %2419 = vmatprep.subr.mxu0 0.0
        %2420 = vmatpush1.msra.mxu0 %v417
        %2421 = vmatprep.subr.mxu0 0.0
        %2422 = vmatpush1.msra.mxu0 %v418
        %2423 = vmatprep.subr.mxu0 0.0
        %2424 = vmatpush1.msra.mxu0 %v419
        %2425 = vmatprep.subr.mxu0 0.0
        %2426 = vmatpush1.msra.mxu0 %v420
        %2427 = vmatprep.subr.mxu0 0.0
        %2428 = vmatpush1.msra.mxu0 %v421
        %2429 = vmatprep.subr.mxu0 0.0
        %2430 = vmatpush1.msra.mxu0 0.0
        %2431 = vmatprep.subr.mxu0 0.0
        %2432 = vmatpush1.msra.mxu0 0.0
        %2433 = vmatprep.subr.mxu0 0.0
        %2434 = vmatpush1.msra.mxu0 0.0
        %2435 = vmatprep.subr.mxu0 0.0
        %2436 = vmatpush1.msra.mxu0 0.0
        %2437 = vmatprep.subr.mxu0 0.0
        %2438 = vmatpush1.msra.mxu0 0.0
        %2439 = vmatprep.subr.mxu0 0.0
        %2440 = vmatpush1.msra.mxu0 0.0
        %2441 = vmatprep.subr.mxu0 0.0
        %2442 = vmatpush1.msra.mxu0 0.0
        %2443 = vmatprep.subr.mxu0 0.0
        %2444 = vmatpush1.msra.mxu0 0.0
        %2445 = vmatprep.subr.mxu0 0.0
        %2446 = vmatpush1.msra.mxu0 0.0
        %2447 = vmatprep.subr.mxu0 0.0
        %2448 = vmatpush1.msra.mxu0 0.0
        %2449 = vmatprep.subr.mxu0 0.0
        %2450 = vmatpush1.msra.mxu0 0.0
        %2451 = vmatprep.subr.mxu0 0.0
        %2452 = vmatpush1.msra.mxu0 0.0
        %2453 = vmatprep.subr.mxu0 0.0
        %2454 = vmatpush1.msra.mxu0 0.0
        %2455 = vmatprep.subr.mxu0 0.0
        %2456 = vmatpush1.msra.mxu0 0.0
        %2457 = vmatprep.subr.mxu0 0.0
        %2458 = vmatpush1.msra.mxu0 0.0
        %2459 = vmatprep.subr.mxu0 0.0
        %2460 = vmatpush1.msra.mxu0 0.0
        %2461 = vmatprep.mubr.f32.mxu0 0.0
        %2462 = vmatmul.mubr.f32.gmra.mrb[0].mxu0 %v2075
        %v2463 = vpop.f32.mrb[0].mxu0
        %v2464 = vadd.f32 0.0, %v2463
        %v2465 = vpop.f32.mrb[0].mxu0
        %2466 = vmatprep.mubr.f32.mxu0 0.0
        %2467 = vmatmul.mubr.f32.gmra.mrb[0].mxu0 %v2076
        %v2468 = vpop.f32.mrb[0].mxu0
        %v2469 = vadd.f32 0.0, %v2468
        %v2470 = vpop.f32.mrb[0].mxu0
        %2471 = vmatprep.mubr.f32.mxu0 0.0
        %2472 = vmatmul.mubr.f32.gmra.mrb[0].mxu0 %v2077
        %v2473 = vpop.f32.mrb[0].mxu0
        %v2474 = vadd.f32 0.0, %v2473
        %v2475 = vpop.f32.mrb[0].mxu0
        %2476 = vmatprep.mubr.f32.mxu0 0.0
        %2477 = vmatmul.mubr.f32.gmra.mrb[0].mxu0 %v2078
        %v2478 = vpop.f32.mrb[0].mxu0
        %v2479 = vadd.f32 0.0, %v2478
        %v2480 = vpop.f32.mrb[0].mxu0
        %2481 = vmatprep.mubr.f32.mxu0 0.0
        %2482 = vmatmul.mubr.f32.gmra.mrb[0].mxu0 %v2079
        %v2483 = vpop.f32.mrb[0].mxu0
        %v2484 = vadd.f32 0.0, %v2483
        %v2485 = vpop.f32.mrb[0].mxu0
        %2486 = vmatprep.mubr.f32.mxu0 0.0
        %2487 = vmatmul.mubr.f32.gmra.mrb[0].mxu0 %v2080
        %v2488 = vpop.f32.mrb[0].mxu0
        %v2489 = vadd.f32 0.0, %v2488
        %v2490 = vpop.f32.mrb[0].mxu0
        %2491 = vmatprep.mubr.f32.mxu0 0.0
        %2492 = vmatmul.mubr.f32.gmra.mrb[0].mxu0 %v2081
        %v2493 = vpop.f32.mrb[0].mxu0
        %v2494 = vadd.f32 0.0, %v2493
        %v2495 = vpop.f32.mrb[0].mxu0
        %2496 = vmatprep.mubr.f32.mxu0 0.0
        %2497 = vmatmul.mubr.f32.gmra.mrb[0].mxu0 %v2082
        %v2498 = vpop.f32.mrb[0].mxu0
        %v2499 = vadd.f32 0.0, %v2498
        %v2500 = vpop.f32.mrb[0].mxu0
        %2501 = vmatprep.mubr.f32.mxu0 0.0
        %2502 = vmatmul.mubr.f32.gmra.mrb[0].mxu0 %v2083
        %v2503 = vpop.f32.mrb[0].mxu0
        %v2504 = vadd.f32 0.0, %v2503
        %v2505 = vpop.f32.mrb[0].mxu0
        %2506 = vmatprep.mubr.f32.mxu0 0.0
        %2507 = vmatmul.mubr.f32.gmra.mrb[0].mxu0 %v2084
        %v2508 = vpop.f32.mrb[0].mxu0
        %v2509 = vadd.f32 0.0, %v2508
        %v2510 = vpop.f32.mrb[0].mxu0
        %2511 = vmatprep.mubr.f32.mxu0 0.0
        %2512 = vmatmul.mubr.f32.gmra.mrb[0].mxu0 %v2085
        %v2513 = vpop.f32.mrb[0].mxu0
        %v2514 = vadd.f32 0.0, %v2513
        %v2515 = vpop.f32.mrb[0].mxu0
        %2516 = vmatprep.mubr.f32.mxu0 0.0
        %2517 = vmatmul.mubr.f32.gmra.mrb[0].mxu0 %v2086
        %v2518 = vpop.f32.mrb[0].mxu0
        %v2519 = vadd.f32 0.0, %v2518
        %v2520 = vpop.f32.mrb[0].mxu0
        %2521 = vmatprep.mubr.f32.mxu0 0.0
        %2522 = vmatmul.mubr.f32.gmra.mrb[0].mxu0 %v2087
        %v2523 = vpop.f32.mrb[0].mxu0
        %v2524 = vadd.f32 0.0, %v2523
        %v2525 = vpop.f32.mrb[0].mxu0
        %2526 = vmatprep.mubr.f32.mxu0 0.0
        %2527 = vmatmul.mubr.f32.gmra.mrb[0].mxu0 %v2088
        %v2528 = vpop.f32.mrb[0].mxu0
        %v2529 = vadd.f32 0.0, %v2528
        %v2530 = vpop.f32.mrb[0].mxu0
        %2531 = vmatprep.mubr.f32.mxu0 0.0
        %2532 = vmatmul.mubr.f32.gmra.mrb[0].mxu0 %v2089
        %v2533 = vpop.f32.mrb[0].mxu0
        %v2534 = vadd.f32 0.0, %v2533
        %v2535 = vpop.f32.mrb[0].mxu0
        %2536 = vmatprep.mubr.f32.mxu0 0.0
        %2537 = vmatmul.mubr.f32.gmra.mrb[0].mxu0 %v2090
        %v2538 = vpop.f32.mrb[0].mxu0
        %v2539 = vadd.f32 0.0, %v2538
        %v2540 = vpop.f32.mrb[0].mxu0
        %2541 = vdwg.mxu0
        %2542 = vmatprep.subr.mxu0 0.0
        %2543 = vmatpush1.msra.mxu0 %v422
        %2544 = vmatprep.subr.mxu0 0.0
        %2545 = vmatpush1.msra.mxu0 %v423
        %2546 = vmatprep.subr.mxu0 0.0
        %2547 = vmatpush1.msra.mxu0 %v424
        %2548 = vmatprep.subr.mxu0 0.0
        %2549 = vmatpush1.msra.mxu0 %v425
        %2550 = vmatprep.subr.mxu0 0.0
        %2551 = vmatpush1.msra.mxu0 %v426
        %2552 = vmatprep.subr.mxu0 0.0
        %2553 = vmatpush1.msra.mxu0 %v427
        %2554 = vmatprep.subr.mxu0 0.0
        %2555 = vmatpush1.msra.mxu0 %v428
        %2556 = vmatprep.subr.mxu0 0.0
        %2557 = vmatpush1.msra.mxu0 %v429
        %2558 = vmatprep.subr.mxu0 0.0
        %2559 = vmatpush1.msra.mxu0 %v430
        %2560 = vmatprep.subr.mxu0 0.0
        %2561 = vmatpush1.msra.mxu0 %v431
        %2562 = vmatprep.subr.mxu0 0.0
        %2563 = vmatpush1.msra.mxu0 %v432
        %2564 = vmatprep.subr.mxu0 0.0
        %2565 = vmatpush1.msra.mxu0 %v433
        %2566 = vmatprep.subr.mxu0 0.0
        %2567 = vmatpush1.msra.mxu0 %v434
        %2568 = vmatprep.subr.mxu0 0.0
        %2569 = vmatpush1.msra.mxu0 %v435
        %2570 = vmatprep.subr.mxu0 0.0
        %2571 = vmatpush1.msra.mxu0 %v436
        %2572 = vmatprep.subr.mxu0 0.0
        %2573 = vmatpush1.msra.mxu0 %v437
        %2574 = vmatprep.subr.mxu0 0.0
        %2575 = vmatpush1.msra.mxu0 0.0
        %2576 = vmatprep.subr.mxu0 0.0
        %2577 = vmatpush1.msra.mxu0 0.0
        %2578 = vmatprep.subr.mxu0 0.0
        %2579 = vmatpush1.msra.mxu0 0.0
        %2580 = vmatprep.subr.mxu0 0.0
        %2581 = vmatpush1.msra.mxu0 0.0
        %2582 = vmatprep.subr.mxu0 0.0
        %2583 = vmatpush1.msra.mxu0 0.0
        %2584 = vmatprep.subr.mxu0 0.0
        %2585 = vmatpush1.msra.mxu0 0.0
        %2586 = vmatprep.subr.mxu0 0.0
        %2587 = vmatpush1.msra.mxu0 0.0
        %2588 = vmatprep.subr.mxu0 0.0
        %2589 = vmatpush1.msra.mxu0 0.0
        %2590 = vmatprep.subr.mxu0 0.0
        %2591 = vmatpush1.msra.mxu0 0.0
        %2592 = vmatprep.subr.mxu0 0.0
        %2593 = vmatpush1.msra.mxu0 0.0
        %2594 = vmatprep.subr.mxu0 0.0
        %2595 = vmatpush1.msra.mxu0 0.0
        %2596 = vmatprep.subr.mxu0 0.0
        %2597 = vmatpush1.msra.mxu0 0.0
        %2598 = vmatprep.subr.mxu0 0.0
        %2599 = vmatpush1.msra.mxu0 0.0
        %2600 = vmatprep.subr.mxu0 0.0
        %2601 = vmatpush1.msra.mxu0 0.0
        %2602 = vmatprep.subr.mxu0 0.0
        %2603 = vmatpush1.msra.mxu0 0.0
        %2604 = vmatprep.subr.mxu0 0.0
        %2605 = vmatpush1.msra.mxu0 0.0
        %2606 = vmatprep.mubr.f32.mxu0 0.0
        %2607 = vmatmul.mubr.f32.gmra.mrb[0].mxu0 %v2091
        %v2608 = vpop.f32.mrb[0].mxu0
        %v2609 = vadd.f32 0.0, %v2608
        %v2610 = vpop.f32.mrb[0].mxu0
        %2611 = vmatprep.mubr.f32.mxu0 0.0
        %2612 = vmatmul.mubr.f32.gmra.mrb[0].mxu0 %v2092
        %v2613 = vpop.f32.mrb[0].mxu0
        %v2614 = vadd.f32 0.0, %v2613
        %v2615 = vpop.f32.mrb[0].mxu0
        %2616 = vmatprep.mubr.f32.mxu0 0.0
        %2617 = vmatmul.mubr.f32.gmra.mrb[0].mxu0 %v2093
        %v2618 = vpop.f32.mrb[0].mxu0
        %v2619 = vadd.f32 0.0, %v2618
        %v2620 = vpop.f32.mrb[0].mxu0
        %2621 = vmatprep.mubr.f32.mxu0 0.0
        %2622 = vmatmul.mubr.f32.gmra.mrb[0].mxu0 %v2094
        %v2623 = vpop.f32.mrb[0].mxu0
        %v2624 = vadd.f32 0.0, %v2623
        %v2625 = vpop.f32.mrb[0].mxu0
        %2626 = vmatprep.mubr.f32.mxu0 0.0
        %2627 = vmatmul.mubr.f32.gmra.mrb[0].mxu0 %v2095
        %v2628 = vpop.f32.mrb[0].mxu0
        %v2629 = vadd.f32 0.0, %v2628
        %v2630 = vpop.f32.mrb[0].mxu0
        %2631 = vmatprep.mubr.f32.mxu0 0.0
        %2632 = vmatmul.mubr.f32.gmra.mrb[0].mxu0 %v2096
        %v2633 = vpop.f32.mrb[0].mxu0
        %v2634 = vadd.f32 0.0, %v2633
        %v2635 = vpop.f32.mrb[0].mxu0
        %2636 = vmatprep.mubr.f32.mxu0 0.0
        %2637 = vmatmul.mubr.f32.gmra.mrb[0].mxu0 %v2097
        %v2638 = vpop.f32.mrb[0].mxu0
        %v2639 = vadd.f32 0.0, %v2638
        %v2640 = vpop.f32.mrb[0].mxu0
        %2641 = vmatprep.mubr.f32.mxu0 0.0
        %2642 = vmatmul.mubr.f32.gmra.mrb[0].mxu0 %v2098
        %v2643 = vpop.f32.mrb[0].mxu0
        %v2644 = vadd.f32 0.0, %v2643
        %v2645 = vpop.f32.mrb[0].mxu0
        %2646 = vmatprep.mubr.f32.mxu0 0.0
        %2647 = vmatmul.mubr.f32.gmra.mrb[0].mxu0 %v2099
        %v2648 = vpop.f32.mrb[0].mxu0
        %v2649 = vadd.f32 0.0, %v2648
        %v2650 = vpop.f32.mrb[0].mxu0
        %2651 = vmatprep.mubr.f32.mxu0 0.0
        %2652 = vmatmul.mubr.f32.gmra.mrb[0].mxu0 %v2100
        %v2653 = vpop.f32.mrb[0].mxu0
        %v2654 = vadd.f32 0.0, %v2653
        %v2655 = vpop.f32.mrb[0].mxu0
        %2656 = vmatprep.mubr.f32.mxu0 0.0
        %2657 = vmatmul.mubr.f32.gmra.mrb[0].mxu0 %v2101
        %v2658 = vpop.f32.mrb[0].mxu0
        %v2659 = vadd.f32 0.0, %v2658
        %v2660 = vpop.f32.mrb[0].mxu0
        %2661 = vmatprep.mubr.f32.mxu0 0.0
        %2662 = vmatmul.mubr.f32.gmra.mrb[0].mxu0 %v2102
        %v2663 = vpop.f32.mrb[0].mxu0
        %v2664 = vadd.f32 0.0, %v2663
        %v2665 = vpop.f32.mrb[0].mxu0
        %2666 = vmatprep.mubr.f32.mxu0 0.0
        %2667 = vmatmul.mubr.f32.gmra.mrb[0].mxu0 %v2103
        %v2668 = vpop.f32.mrb[0].mxu0
        %v2669 = vadd.f32 0.0, %v2668
        %v2670 = vpop.f32.mrb[0].mxu0
        %2671 = vmatprep.mubr.f32.mxu0 0.0
        %2672 = vmatmul.mubr.f32.gmra.mrb[0].mxu0 %v2104
        %v2673 = vpop.f32.mrb[0].mxu0
        %v2674 = vadd.f32 0.0, %v2673
        %v2675 = vpop.f32.mrb[0].mxu0
        %2676 = vmatprep.mubr.f32.mxu0 0.0
        %2677 = vmatmul.mubr.f32.gmra.mrb[0].mxu0 %v2105
        %v2678 = vpop.f32.mrb[0].mxu0
        %v2679 = vadd.f32 0.0, %v2678
        %v2680 = vpop.f32.mrb[0].mxu0
        %2681 = vmatprep.mubr.f32.mxu0 0.0
        %2682 = vmatmul.mubr.f32.gmra.mrb[0].mxu0 %v2106
        %v2683 = vpop.f32.mrb[0].mxu0
        %v2684 = vadd.f32 0.0, %v2683
        %v2685 = vpop.f32.mrb[0].mxu0
        %2686 = vdwg.mxu0
        %2687 = vst [vmem:[%s269] sm:$0xff] %v2043
        %2688 = vst [vmem:[%s269 + $0x8] sm:$0xff] %v2044
        %2689 = vst [vmem:[%s269 + $0x10] sm:$0xff] %v2045
        %2690 = vst [vmem:[%s269 + $0x18] sm:$0xff] %v2046
        %2691 = vst [vmem:[%s269 + $0x20] sm:$0xff] %v2047
        %2692 = vst [vmem:[%s269 + $0x28] sm:$0xff] %v2048
        %2693 = vst [vmem:[%s269 + $0x30] sm:$0xff] %v2049
        %2694 = vst [vmem:[%s269 + $0x38] sm:$0xff] %v2050
        %2695 = vst [vmem:[%s269 + $0x40] sm:$0xff] %v2051
        %2696 = vst [vmem:[%s269 + $0x48] sm:$0xff] %v2052
        %2697 = vst [vmem:[%s269 + $0x50] sm:$0xff] %v2053
        %2698 = vst [vmem:[%s269 + $0x58] sm:$0xff] %v2054
        %2699 = vst [vmem:[%s269 + $0x60] sm:$0xff] %v2055
        %2700 = vst [vmem:[%s269 + $0x68] sm:$0xff] %v2056
        %2701 = vst [vmem:[%s269 + $0x70] sm:$0xff] %v2057
        %2702 = vst [vmem:[%s269 + $0x78] sm:$0xff] %v2058
        %2703 = vst [vmem:[%s269 + $0x80] sm:$0xff] %v2059
        %2704 = vst [vmem:[%s269 + $0x88] sm:$0xff] %v2060
        %2705 = vst [vmem:[%s269 + $0x90] sm:$0xff] %v2061
        %2706 = vst [vmem:[%s269 + $0x98] sm:$0xff] %v2062
        %2707 = vst [vmem:[%s269 + $0xa0] sm:$0xff] %v2063
        %2708 = vst [vmem:[%s269 + $0xa8] sm:$0xff] %v2064
        %2709 = vst [vmem:[%s269 + $0xb0] sm:$0xff] %v2065
        %2710 = vst [vmem:[%s269 + $0xb8] sm:$0xff] %v2066
        %2711 = vst [vmem:[%s269 + $0xc0] sm:$0xff] %v2067
        %2712 = vst [vmem:[%s269 + $0xc8] sm:$0xff] %v2068
        %2713 = vst [vmem:[%s269 + $0xd0] sm:$0xff] %v2069
        %2714 = vst [vmem:[%s269 + $0xd8] sm:$0xff] %v2070
        %2715 = vst [vmem:[%s269 + $0xe0] sm:$0xff] %v2071
        %2716 = vst [vmem:[%s269 + $0xe8] sm:$0xff] %v2072
        %2717 = vst [vmem:[%s269 + $0xf0] sm:$0xff] %v2073
        %2718 = vst [vmem:[%s269 + $0xf8] sm:$0xff] %v2074
        %2719 = vst [vmem:[%s269 + $0x100] sm:$0xff] %v2075
        %2720 = vst [vmem:[%s269 + $0x108] sm:$0xff] %v2076
        %2721 = vst [vmem:[%s269 + $0x110] sm:$0xff] %v2077
        %2722 = vst [vmem:[%s269 + $0x118] sm:$0xff] %v2078
        %2723 = vst [vmem:[%s269 + $0x120] sm:$0xff] %v2079
        %2724 = vst [vmem:[%s269 + $0x128] sm:$0xff] %v2080
        %2725 = vst [vmem:[%s269 + $0x130] sm:$0xff] %v2081
        %2726 = vst [vmem:[%s269 + $0x138] sm:$0xff] %v2082
        %2727 = vst [vmem:[%s269 + $0x140] sm:$0xff] %v2083
        %2728 = vst [vmem:[%s269 + $0x148] sm:$0xff] %v2084
        %2729 = vst [vmem:[%s269 + $0x150] sm:$0xff] %v2085
        %2730 = vst [vmem:[%s269 + $0x158] sm:$0xff] %v2086
        %2731 = vst [vmem:[%s269 + $0x160] sm:$0xff] %v2087
        %2732 = vst [vmem:[%s269 + $0x168] sm:$0xff] %v2088
        %2733 = vst [vmem:[%s269 + $0x170] sm:$0xff] %v2089
        %2734 = vst [vmem:[%s269 + $0x178] sm:$0xff] %v2090
        %2735 = vst [vmem:[%s269 + $0x180] sm:$0xff] %v2091
        %2736 = vst [vmem:[%s269 + $0x188] sm:$0xff] %v2092
        %2737 = vst [vmem:[%s269 + $0x190] sm:$0xff] %v2093
        %2738 = vst [vmem:[%s269 + $0x198] sm:$0xff] %v2094
        %2739 = vst [vmem:[%s269 + $0x1a0] sm:$0xff] %v2095
        %2740 = vst [vmem:[%s269 + $0x1a8] sm:$0xff] %v2096
        %2741 = vst [vmem:[%s269 + $0x1b0] sm:$0xff] %v2097
        %2742 = vst [vmem:[%s269 + $0x1b8] sm:$0xff] %v2098
        %2743 = vst [vmem:[%s269 + $0x1c0] sm:$0xff] %v2099
        %2744 = vst [vmem:[%s269 + $0x1c8] sm:$0xff] %v2100
        %2745 = vst [vmem:[%s269 + $0x1d0] sm:$0xff] %v2101
        %2746 = vst [vmem:[%s269 + $0x1d8] sm:$0xff] %v2102
        %2747 = vst [vmem:[%s269 + $0x1e0] sm:$0xff] %v2103
        %2748 = vst [vmem:[%s269 + $0x1e8] sm:$0xff] %v2104
        %2749 = vst [vmem:[%s269 + $0x1f0] sm:$0xff] %v2105
        %2750 = vst [vmem:[%s269 + $0x1f8] sm:$0xff] %v2106
        %2751 = vst.msk [vmem:[%s305] sm:$0xff] %vm566, %v2174
        %2752 = vst.msk [vmem:[%s305 + $0x8] sm:$0xff] %vm566, %v2179
        %2753 = vst.msk [vmem:[%s305 + $0x10] sm:$0xff] %vm566, %v2184
        %2754 = vst.msk [vmem:[%s305 + $0x18] sm:$0xff] %vm566, %v2189
        %2755 = vst.msk [vmem:[%s305 + $0x20] sm:$0xff] %vm566, %v2194
        %2756 = vst.msk [vmem:[%s305 + $0x28] sm:$0xff] %vm566, %v2199
        %2757 = vst.msk [vmem:[%s305 + $0x30] sm:$0xff] %vm566, %v2204
        %2758 = vst.msk [vmem:[%s305 + $0x38] sm:$0xff] %vm566, %v2209
        %2759 = vst.msk [vmem:[%s305 + $0x40] sm:$0xff] %vm566, %v2214
        %2760 = vst.msk [vmem:[%s305 + $0x48] sm:$0xff] %vm566, %v2219
        %2761 = vst.msk [vmem:[%s305 + $0x50] sm:$0xff] %vm566, %v2224
        %2762 = vst.msk [vmem:[%s305 + $0x58] sm:$0xff] %vm566, %v2229
        %2763 = vst.msk [vmem:[%s305 + $0x60] sm:$0xff] %vm566, %v2234
        %2764 = vst.msk [vmem:[%s305 + $0x68] sm:$0xff] %vm566, %v2239
        %2765 = vst.msk [vmem:[%s305 + $0x70] sm:$0xff] %vm566, %v2244
        %2766 = vst.msk [vmem:[%s305 + $0x78] sm:$0xff] %vm566, %v2249
        %2767 = vst.msk [vmem:[%s305 + $0x80] sm:$0xff] %vm566, %v2319
        %2768 = vst.msk [vmem:[%s305 + $0x88] sm:$0xff] %vm566, %v2324
        %2769 = vst.msk [vmem:[%s305 + $0x90] sm:$0xff] %vm566, %v2329
        %2770 = vst.msk [vmem:[%s305 + $0x98] sm:$0xff] %vm566, %v2334
        %2771 = vst.msk [vmem:[%s305 + $0xa0] sm:$0xff] %vm566, %v2339
        %2772 = vst.msk [vmem:[%s305 + $0xa8] sm:$0xff] %vm566, %v2344
        %2773 = vst.msk [vmem:[%s305 + $0xb0] sm:$0xff] %vm566, %v2349
        %2774 = vst.msk [vmem:[%s305 + $0xb8] sm:$0xff] %vm566, %v2354
        %2775 = vst.msk [vmem:[%s305 + $0xc0] sm:$0xff] %vm566, %v2359
        %2776 = vst.msk [vmem:[%s305 + $0xc8] sm:$0xff] %vm566, %v2364
        %2777 = vst.msk [vmem:[%s305 + $0xd0] sm:$0xff] %vm566, %v2369
        %2778 = vst.msk [vmem:[%s305 + $0xd8] sm:$0xff] %vm566, %v2374
        %2779 = vst.msk [vmem:[%s305 + $0xe0] sm:$0xff] %vm566, %v2379
        %2780 = vst.msk [vmem:[%s305 + $0xe8] sm:$0xff] %vm566, %v2384
        %2781 = vst.msk [vmem:[%s305 + $0xf0] sm:$0xff] %vm566, %v2389
        %2782 = vst.msk [vmem:[%s305 + $0xf8] sm:$0xff] %vm566, %v2394
        %2783 = vst.msk [vmem:[%s305 + $0x100] sm:$0xff] %vm566, %v2464
        %2784 = vst.msk [vmem:[%s305 + $0x108] sm:$0xff] %vm566, %v2469
        %2785 = vst.msk [vmem:[%s305 + $0x110] sm:$0xff] %vm566, %v2474
        %2786 = vst.msk [vmem:[%s305 + $0x118] sm:$0xff] %vm566, %v2479
        %2787 = vst.msk [vmem:[%s305 + $0x120] sm:$0xff] %vm566, %v2484
        %2788 = vst.msk [vmem:[%s305 + $0x128] sm:$0xff] %vm566, %v2489
        %2789 = vst.msk [vmem:[%s305 + $0x130] sm:$0xff] %vm566, %v2494
        %2790 = vst.msk [vmem:[%s305 + $0x138] sm:$0xff] %vm566, %v2499
        %2791 = vst.msk [vmem:[%s305 + $0x140] sm:$0xff] %vm566, %v2504
        %2792 = vst.msk [vmem:[%s305 + $0x148] sm:$0xff] %vm566, %v2509
        %2793 = vst.msk [vmem:[%s305 + $0x150] sm:$0xff] %vm566, %v2514
        %2794 = vst.msk [vmem:[%s305 + $0x158] sm:$0xff] %vm566, %v2519
        %2795 = vst.msk [vmem:[%s305 + $0x160] sm:$0xff] %vm566, %v2524
        %2796 = vst.msk [vmem:[%s305 + $0x168] sm:$0xff] %vm566, %v2529
        %2797 = vst.msk [vmem:[%s305 + $0x170] sm:$0xff] %vm566, %v2534
        %2798 = vst.msk [vmem:[%s305 + $0x178] sm:$0xff] %vm566, %v2539
        %2799 = vst.msk [vmem:[%s305 + $0x180] sm:$0xff] %vm566, %v2609
        %2800 = vst.msk [vmem:[%s305 + $0x188] sm:$0xff] %vm566, %v2614
        %2801 = vst.msk [vmem:[%s305 + $0x190] sm:$0xff] %vm566, %v2619
        %2802 = vst.msk [vmem:[%s305 + $0x198] sm:$0xff] %vm566, %v2624
        %2803 = vst.msk [vmem:[%s305 + $0x1a0] sm:$0xff] %vm566, %v2629
        %2804 = vst.msk [vmem:[%s305 + $0x1a8] sm:$0xff] %vm566, %v2634
        %2805 = vst.msk [vmem:[%s305 + $0x1b0] sm:$0xff] %vm566, %v2639
        %2806 = vst.msk [vmem:[%s305 + $0x1b8] sm:$0xff] %vm566, %v2644
        %2807 = vst.msk [vmem:[%s305 + $0x1c0] sm:$0xff] %vm566, %v2649
        %2808 = vst.msk [vmem:[%s305 + $0x1c8] sm:$0xff] %vm566, %v2654
        %2809 = vst.msk [vmem:[%s305 + $0x1d0] sm:$0xff] %vm566, %v2659
        %2810 = vst.msk [vmem:[%s305 + $0x1d8] sm:$0xff] %vm566, %v2664
        %2811 = vst.msk [vmem:[%s305 + $0x1e0] sm:$0xff] %vm566, %v2669
        %2812 = vst.msk [vmem:[%s305 + $0x1e8] sm:$0xff] %vm566, %v2674
        %2813 = vst.msk [vmem:[%s305 + $0x1f0] sm:$0xff] %vm566, %v2679
        %2814 = vst.msk [vmem:[%s305 + $0x1f8] sm:$0xff] %vm566, %v2684
        %s2815 = smul.u32 4, %s23
        %s2816 = smul.u32 16, %s24
        %p2817 = scmp.lt.s32.totalorder %s2815, 7
        %s2818 = scalar_select %p2817, %s2815, 7
        %p2819 = scmp.lt.s32.totalorder %s2816, 15
        %s2820 = scalar_select %p2819, %s2816, 15
        %s2821 = smul.addr %s2818, 16
        %s2822 = sadd.s32 %s2820, %s2821
        %s2823 = smul.addr %s2822, 8
        %s2824 = scalar_lea.vmem %s3, %s2823
        %s2825 = sand.u32 %s149, 1
        %s2826 = scalar_lea.sflag [#allocation3], %s2825
        %s2827 = sand.u32 %s149, 1
        %s2828 = smul.addr %s2827, 512
        %s2829 = scalar_lea.vmem [#allocation2], %s2828
        // Predicated region
        $region33: #{scaled_dot_product_attention.1} parent=31 // pred_check
          %p2830 = pneg %p131
        $region34: #{scaled_dot_product_attention.1} parent=31 // pred_check_branch
          %2832 = sbr.rel (%p2830) target = $region36
        $region35: #{scaled_dot_product_attention.1} parent=31 // pred_region
          %s2833 = smul.u32 4, %s23
          %s2834 = smul.u32 16, %s24
        $region36: #{scaled_dot_product_attention.1} parent=31 // pred_fallthru
          _
        // Predicated region
        $region37: #{scaled_dot_product_attention.1} parent=31 // pred_check
          %p2835 = pneg %p159
        $region38: #{scaled_dot_product_attention.1} parent=31 // pred_check_branch
          %2837 = sbr.rel (%p2835) target = $region40
        $region39: #{scaled_dot_product_attention.1} parent=31 // pred_region
          %s2838 = smul.u32 4, %s23
          %s2839 = smul.u32 16, %s24
          %s2841 = ssub.s32 8192, 8192
          %2842 = vsyncadd %s2826, %s2841
          %s2843 = smul.addr %s2838, 16
          %s2844 = sadd.s32 %s2839, %s2843
          %s2845 = smul.addr %s2844, 128
          %s2846 = scalar_lea.hbm %s4, %s2845
          %s2847 = sshll.u32 %s2829, 4
          %s2848 = int_to_ptr.vmem [resolvable:$true] %s2847
          %2853 = dma.vmem_to_hbm [thread:$0]  %s2848, 8192, %s2846, %s2826, 128, 128, 8
        $region40: #{scaled_dot_product_attention.1} parent=31 // pred_fallthru
          _
      $region32: #{scaled_dot_product_attention.1} parent=5 // pred_fallthru
        _
      %p2854 = scmp.le.s32.totalorder 2, %s14
      // Predicated region
      $region41: #{scaled_dot_product_attention.1} parent=5 // pred_check
        %p2855 = pneg %p2854
      $region42: #{scaled_dot_product_attention.1} parent=5 // pred_check_branch
        %2857 = sbr.rel (%p2855) target = $region44
      $region43: #{scaled_dot_product_attention.1} parent=5 // pred_region
        %s2858 = ssub.s32 %s14, 2
        // Predicated region
        $region45: #{scaled_dot_product_attention.1} parent=43 // pred_check
          %p2859 = pneg %p137
        $region46: #{scaled_dot_product_attention.1} parent=43 // pred_check_branch
          %2861 = sbr.rel (%p2859) target = $region48
        $region47: #{scaled_dot_product_attention.1} parent=43 // pred_region
          %s2862 = smul.u32 4, %s25
          %s2863 = smul.u32 16, %s26
          %p2864 = scmp.lt.s32.totalorder %s2862, 7
          %s2865 = scalar_select %p2864, %s2862, 7
          %p2866 = scmp.lt.s32.totalorder %s2863, 15
          %s2867 = scalar_select %p2866, %s2863, 15
          %s2868 = smul.addr %s2865, 16
          %s2869 = sadd.s32 %s2867, %s2868
          %s2870 = smul.addr %s2869, 8
          %s2871 = scalar_lea.vmem %s3, %s2870
        $region48: #{scaled_dot_product_attention.1} parent=43 // pred_fallthru
          _
        // Predicated region
        $region49: #{scaled_dot_product_attention.1} parent=43 // pred_check
          %p2872 = pneg %p165
        $region50: #{scaled_dot_product_attention.1} parent=43 // pred_check_branch
          %2874 = sbr.rel (%p2872) target = $region52
        $region51: #{scaled_dot_product_attention.1} parent=43 // pred_region
          %s2875 = sand.u32 %s150, 1
          %s2876 = scalar_lea.sflag [#allocation3], %s2875
          %s2877 = sand.u32 %s150, 1
          %s2878 = smul.addr %s2877, 512
          %s2879 = scalar_lea.vmem [#allocation2], %s2878
          %2880 = dma.done %s2876, 8192
        $region52: #{scaled_dot_product_attention.1} parent=43 // pred_fallthru
          _
      $region44: #{scaled_dot_product_attention.1} parent=5 // pred_fallthru
        _
    $region6: #{scaled_dot_product_attention.1} parent=1 // loop_footer
      %s18 = sadd.s32 1, %s14
    $region7: #{scaled_dot_product_attention.1} parent=1 // loop_footer_branch
      %13 = sbr.rel target = $region3
    $region8: #{scaled_dot_product_attention.1} parent=1 // loop_exit
      _
    %2881 = vsyncpa [#allocation3], 1
    %s2882 = scalar_lea.sflag [#allocation3], 1
    %2883 = vsyncpa %s2882, 1

</llo_original>
